<compile_context>
chip_gen: v6e
topology: v6e:2x2x1
jax: 0.10.0
libtpu: 0.0.40
codegen_flags: <defaults>
</compile_context>

<pallas_src>
import numpy as np
import jax
import jax.numpy as jnp
from jax import lax
from jax.experimental import pallas as pl
from jax.experimental.pallas import tpu as pltpu


# PyTorch LSTM gate order is (i, f, g, o); the kernel stacks (i, f, o, g) so a single
# sigmoid covers the first 3H lanes and a single tanh covers the last H lanes.
_GATE_PERM = (0, 1, 3, 2)


def _round_up(x, m):
    return (x + m - 1) // m * m


# ------------------------------ Pallas kernel -------------------------------

def make_air_kernel(num_layers, seq_len, batch_pad, hidden_pad, matmul_dtype=None):
    """Build the fused AirModel kernel for static shapes.

    Ref layout (all VMEM, time-major, flattened to 2-D):
      inputs : x (T*Bp, D0),
               per layer: wih (D_in, 4Hp), whh (Hp, 4Hp), b (1, 4Hp),
               w_lin (Hp, Cp), b_lin (1, Cp)
      output : (Bp, Cp)
      scratch: gates (T*Bp, 4Hp), seq (T*Bp, Hp)
    """
    T, Bp, Hp = seq_len, batch_pad, hidden_pad

    def cast(a):
        return a if matmul_dtype is None else a.astype(matmul_dtype)

    def kernel(*refs):
        x_ref = refs[0]
        layer_refs = refs[1:1 + 3 * num_layers]
        w_lin_ref = refs[1 + 3 * num_layers]
        b_lin_ref = refs[2 + 3 * num_layers]
        out_ref = refs[3 + 3 * num_layers]
        gates_scr = refs[4 + 3 * num_layers]   # (T*Bp, 4Hp) hoisted pre-activations
        seq_scr = refs[5 + 3 * num_layers]     # (T*Bp, Hp)  hidden sequence buffer

        h = jnp.zeros((Bp, Hp), jnp.float32)
        for layer in range(num_layers):
            wih_ref = layer_refs[3 * layer + 0]
            whh_ref = layer_refs[3 * layer + 1]
            b_ref = layer_refs[3 * layer + 2]

            # ---- hoisted input projection (all timesteps at once, bias folded) ----
            xin = x_ref[...] if layer == 0 else seq_scr[...]
            gates_scr[...] = (
                jnp.dot(cast(xin), cast(wih_ref[...]),
                        preferred_element_type=jnp.float32)
                + b_ref[...])

            # ---- serial recurrence: one (Bp,Hp)x(Hp,4Hp) matmul per step ----
            whh = cast(whh_ref[...])
            h = jnp.zeros((Bp, Hp), jnp.float32)
            c = jnp.zeros((Bp, Hp), jnp.float32)
            for t in range(T):                       # static T -> fully unrolled
                row = t * Bp
                g = gates_scr[pl.ds(row, Bp), :] + jnp.dot(
                    cast(h), whh, preferred_element_type=jnp.float32)
                ifo = jax.nn.sigmoid(g[:, :3 * Hp])      # (Bp, 3Hp) one EUP slab
                gg = jnp.tanh(g[:, 3 * Hp:])             # (Bp, Hp)
                c = ifo[:, Hp:2 * Hp] * c + ifo[:, :Hp] * gg
                h = ifo[:, 2 * Hp:] * jnp.tanh(c)
                if layer + 1 < num_layers:               # last layer: only final h needed
                    seq_scr[pl.ds(row, Bp), :] = h

        # ---- classifier on the last timestep of the last layer ----
        out_ref[...] = (jnp.dot(cast(h), cast(w_lin_ref[...]),
                                preferred_element_type=jnp.float32)
                        + b_lin_ref[...])

    return kernel


_VMEM = pl.BlockSpec(memory_space=pltpu.MemorySpace.VMEM)


def air_model_forward(x, kparams, matmul_dtype=None):
    """x: (B, T, input_size) float32, batch_first like the PyTorch module."""
    B, T, D0 = x.shape
    Hp, Cp, num_class = kparams["Hp"], kparams["Cp"], kparams["num_class"]
    num_layers = len(kparams["lstm"])
    Bp = _round_up(B, 8)                                   # f32 sublane alignment

    # time-major + batch padding, flattened so every in-kernel matmul is 2-D.
    x_tm = jnp.transpose(x, (1, 0, 2))                     # (T, B, D0)
    x_tm = jnp.pad(x_tm, ((0, 0), (0, Bp - B), (0, 0)))
    x_flat = x_tm.reshape(T * Bp, D0)

    inputs = [x_flat]
    for wih, whh, b in kparams["lstm"]:
        inputs += [wih, whh, b]
    inputs += [kparams["w_lin"], kparams["b_lin"]]

    out = pl.pallas_call(
        make_air_kernel(num_layers, T, Bp, Hp, matmul_dtype),
        out_shape=jax.ShapeDtypeStruct((Bp, Cp), jnp.float32),
        in_specs=[_VMEM] * len(inputs),
        out_specs=_VMEM,
        scratch_shapes=[
            pltpu.VMEM((T * Bp, 4 * Hp), jnp.float32),     # hoisted gate pre-acts
            pltpu.VMEM((T * Bp, Hp), jnp.float32),         # hidden-sequence buffer
        ],
    )(*inputs)
    return out[:B, :num_class]


# ----------------------- Parameters (PyTorch layout) ------------------------

def init_params(key, num_class, input_size, hidden_size, num_layers):
    """Raw PyTorch-layout parameters, uniform(-1/sqrt(H), 1/sqrt(H))."""
    stdv = 1.0 / np.sqrt(hidden_size)
    lstm = []
    for layer in range(num_layers):
        d_in = input_size if layer == 0 else hidden_size
        key, k1, k2, k3, k4 = jax.random.split(key, 5)
        w_ih = jax.random.uniform(k1, (4 * hidden_size, d_in), jnp.float32, -stdv, stdv)
        w_hh = jax.random.uniform(k2, (4 * hidden_size, hidden_size), jnp.float32, -stdv, stdv)
        b_ih = jax.random.uniform(k3, (4 * hidden_size,), jnp.float32, -stdv, stdv)
        b_hh = jax.random.uniform(k4, (4 * hidden_size,), jnp.float32, -stdv, stdv)
        lstm.append((w_ih, w_hh, b_ih, b_hh))
    key, k1, k2 = jax.random.split(key, 3)
    w_lin = jax.random.uniform(k1, (num_class, hidden_size), jnp.float32, -stdv, stdv)
    b_lin = jax.random.uniform(k2, (num_class,), jnp.float32, -stdv, stdv)
    return {"lstm": lstm, "linear": (w_lin, b_lin)}


def _stack_gates(w, hidden, hidden_pad, d_in_pad):
    """(4H, D_in) PyTorch order (i,f,g,o) -> (D_in_pad, 4*Hp) kernel order (i,f,o,g)."""
    d_in = w.shape[1]
    w4 = jnp.take(w.reshape(4, hidden, d_in), jnp.array(_GATE_PERM), axis=0)
    w4 = jnp.pad(w4, ((0, 0), (0, hidden_pad - hidden), (0, d_in_pad - d_in)))
    return jnp.transpose(w4, (2, 0, 1)).reshape(d_in_pad, 4 * hidden_pad)


def prepare_kernel_params(params, num_class):
    """Convert PyTorch-layout params to padded, gate-stacked, matmul-ready layout.

    Zero-padded hidden units see zero weights & biases, so their c/h stay exactly 0
    and never perturb the real units; padded lanes are sliced off in the wrapper.
    """
    H = params["lstm"][0][1].shape[1]
    Hp = _round_up(H, 32)              # 4*Hp is a multiple of 128 lanes
    Cp = _round_up(num_class, 128)     # lane-dense classifier output

    lstm = []
    for layer, (w_ih, w_hh, b_ih, b_hh) in enumerate(params["lstm"]):
        d_in_pad = w_ih.shape[1] if layer == 0 else Hp
        wih = _stack_gates(w_ih, H, Hp, d_in_pad)
        whh = _stack_gates(w_hh, H, Hp, Hp)
        b = jnp.take((b_ih + b_hh).reshape(4, H), jnp.array(_GATE_PERM), axis=0)
        b = jnp.pad(b, ((0, 0), (0, Hp - H))).reshape(1, 4 * Hp)
        lstm.append((wih, whh, b))

    w_lin, b_lin = params["linear"]
    w_lin_k = jnp.pad(w_lin.T, ((0, Hp - H), (0, Cp - num_class)))
    b_lin_k = jnp.pad(b_lin, (0, Cp - num_class)).reshape(1, Cp)
    return {"lstm": lstm, "w_lin": w_lin_k, "b_lin": b_lin_k,
            "Hp": Hp, "Cp": Cp, "num_class": num_class}


# --------------------------- Pure-JAX reference -----------------------------

def ref_forward(x, params):
    """Reference with PyTorch LSTM semantics (gate order i, f, g, o, unpadded)."""
    B = x.shape[0]
    h_seq = jnp.transpose(x, (1, 0, 2))                   # (T, B, D)
    for (w_ih, w_hh, b_ih, b_hh) in params["lstm"]:
        H = w_hh.shape[1]

        def step(carry, x_t):
            h, c = carry
            gates = x_t @ w_ih.T + h @ w_hh.T + b_ih + b_hh
            i = jax.nn.sigmoid(gates[:, :H])
            f = jax.nn.sigmoid(gates[:, H:2 * H])
            g = jnp.tanh(gates[:, 2 * H:3 * H])
            o = jax.nn.sigmoid(gates[:, 3 * H:])
            c = f * c + i * g
            h = o * jnp.tanh(c)
            return (h, c), h

        init = (jnp.zeros((B, H), jnp.float32), jnp.zeros((B, H), jnp.float32))
        (_, _), h_seq = lax.scan(step, init, h_seq)
    w_lin, b_lin = params["linear"]
    return h_seq[-1] @ w_lin.T + b_lin


# ---------------------------------- Main -------------------------------------

if __name__ == "__main__":
    B, T, INPUT_SIZE = 2, 8, 10
    HIDDEN_SIZE, NUM_LAYERS, NUM_CLASS = 30, 2, 3

    key = jax.random.PRNGKey(0)
    key, kx, kp = jax.random.split(key, 3)
    x = jax.random.normal(kx, (B, T, INPUT_SIZE), jnp.float32)

    params = init_params(kp, NUM_CLASS, INPUT_SIZE, HIDDEN_SIZE, NUM_LAYERS)
    kparams = prepare_kernel_params(params, NUM_CLASS)

    # matmul_dtype=jnp.bfloat16 is the fast MXU path on v6e/v7x (f32 accumulation);
    # kept at f32 here so the 1e-4 reference check stays tight.
    out = jax.block_until_ready(air_model_forward(x, kparams))
    ref = jax.block_until_ready(ref_forward(x, params))

    assert out.shape == (B, NUM_CLASS), out.shape
    np.testing.assert_allclose(np.asarray(out), np.asarray(ref), atol=1e-4, rtol=1e-4)
    print("KERNEL_OK")
</pallas_src>

<mosaic_0001>
module attributes {stable_mosaic.version = 11 : i64} {
  func.func @kernel(%arg0: memref<64x10xf32, #tpu.memory_space<vmem>>, %arg1: memref<10x128xf32, #tpu.memory_space<vmem>>, %arg2: memref<32x128xf32, #tpu.memory_space<vmem>>, %arg3: memref<1x128xf32, #tpu.memory_space<vmem>>, %arg4: memref<32x128xf32, #tpu.memory_space<vmem>>, %arg5: memref<32x128xf32, #tpu.memory_space<vmem>>, %arg6: memref<1x128xf32, #tpu.memory_space<vmem>>, %arg7: memref<32x128xf32, #tpu.memory_space<vmem>>, %arg8: memref<1x128xf32, #tpu.memory_space<vmem>>, %arg9: memref<8x128xf32, #tpu.memory_space<vmem>>, %arg10: memref<64x128xf32, #tpu.memory_space<vmem>>, %arg11: memref<64x32xf32, #tpu.memory_space<vmem>>) attributes {dimension_semantics = [], scalar_prefetch = 0 : i64, scratch_operands = 2 : i64, tpu.core_type = #tpu.core_type<tc>} {
    %c0 = arith.constant 0 : index
    %c0_0 = arith.constant 0 : index
    %0 = vector.load %arg0[%c0, %c0_0] : memref<64x10xf32, #tpu.memory_space<vmem>>, vector<64x10xf32>
    %c0_1 = arith.constant 0 : index
    %c0_2 = arith.constant 0 : index
    %1 = vector.load %arg1[%c0_1, %c0_2] : memref<10x128xf32, #tpu.memory_space<vmem>>, vector<10x128xf32>
    %cst = arith.constant dense<0.000000e+00> : vector<64x128xf32>
    %2 = tpu.matmul %0, %1, %cst {dimension_numbers = #tpu.dot_dimension_numbers<[1], [0], [0], [1], [0, 0, 1, 1], [], []>} : vector<64x10xf32>, vector<10x128xf32>, vector<64x128xf32> -> vector<64x128xf32>
    %c0_3 = arith.constant 0 : index
    %c0_4 = arith.constant 0 : index
    %3 = vector.load %arg3[%c0_3, %c0_4] : memref<1x128xf32, #tpu.memory_space<vmem>>, vector<1x128xf32>
    %4 = vector.broadcast %3 : vector<1x128xf32> to vector<64x128xf32>
    %5 = arith.addf %2, %4 : vector<64x128xf32>
    %c0_5 = arith.constant 0 : index
    %c0_6 = arith.constant 0 : index
    %6 = vector.load %arg10[%c0_5, %c0_6] : memref<64x128xf32, #tpu.memory_space<vmem>>, vector<64x128xf32>
    tpu.vector_store %arg10[%c0_5, %c0_6], %5 {strides = array<i32>} : memref<64x128xf32, #tpu.memory_space<vmem>>, vector<64x128xf32>,
    %c0_7 = arith.constant 0 : index
    %c0_8 = arith.constant 0 : index
    %7 = vector.load %arg2[%c0_7, %c0_8] : memref<32x128xf32, #tpu.memory_space<vmem>>, vector<32x128xf32>
    %cst_9 = arith.constant 0.000000e+00 : f32
    %8 = vector.broadcast %cst_9 : f32 to vector<8x32xf32>
    %cst_10 = arith.constant 0.000000e+00 : f32
    %9 = vector.broadcast %cst_10 : f32 to vector<8x32xf32>
    %c0_11 = arith.constant 0 : index
    %c0_12 = arith.constant 0 : index
    %10 = vector.load %arg10[%c0_11, %c0_12] : memref<64x128xf32, #tpu.memory_space<vmem>>, vector<8x128xf32>
    %cst_13 = arith.constant dense<0.000000e+00> : vector<8x128xf32>
    %11 = tpu.matmul %8, %7, %cst_13 {dimension_numbers = #tpu.dot_dimension_numbers<[1], [0], [0], [1], [0, 0, 1, 1], [], []>} : vector<8x32xf32>, vector<32x128xf32>, vector<8x128xf32> -> vector<8x128xf32>
    %12 = arith.addf %10, %11 : vector<8x128xf32>
    %13 = vector.extract_strided_slice %12 {offsets = [0, 0], sizes = [8, 96], strides = [1, 1]} : vector<8x128xf32> to vector<8x96xf32>
    %14 = arith.negf %13 : vector<8x96xf32>
    %15 = math.exp %14 : vector<8x96xf32>
    %cst_14 = arith.constant 1.000000e+00 : f32
    %16 = vector.broadcast %cst_14 : f32 to vector<8x96xf32>
    %17 = arith.addf %16, %15 : vector<8x96xf32>
    %18 = arith.divf %16, %17 : vector<8x96xf32>
    %19 = vector.extract_strided_slice %12 {offsets = [0, 96], sizes = [8, 32], strides = [1, 1]} : vector<8x128xf32> to vector<8x32xf32>
    %20 = math.tanh %19 : vector<8x32xf32>
    %21 = vector.extract_strided_slice %18 {offsets = [0, 32], sizes = [8, 32], strides = [1, 1]} : vector<8x96xf32> to vector<8x32xf32>
    %22 = arith.mulf %21, %9 : vector<8x32xf32>
    %23 = vector.extract_strided_slice %18 {offsets = [0, 0], sizes = [8, 32], strides = [1, 1]} : vector<8x96xf32> to vector<8x32xf32>
    %24 = arith.mulf %23, %20 : vector<8x32xf32>
    %25 = arith.addf %22, %24 : vector<8x32xf32>
    %26 = vector.extract_strided_slice %18 {offsets = [0, 64], sizes = [8, 32], strides = [1, 1]} : vector<8x96xf32> to vector<8x32xf32>
    %27 = math.tanh %25 : vector<8x32xf32>
    %28 = arith.mulf %26, %27 : vector<8x32xf32>
    %c0_15 = arith.constant 0 : index
    %c0_16 = arith.constant 0 : index
    %29 = vector.load %arg11[%c0_15, %c0_16] : memref<64x32xf32, #tpu.memory_space<vmem>>, vector<8x32xf32>
    tpu.vector_store %arg11[%c0_15, %c0_16], %28 {strides = array<i32>} : memref<64x32xf32, #tpu.memory_space<vmem>>, vector<8x32xf32>,
    %c8 = arith.constant 8 : index
    %c0_17 = arith.constant 0 : index
    %30 = vector.load %arg10[%c8, %c0_17] : memref<64x128xf32, #tpu.memory_space<vmem>>, vector<8x128xf32>
    %cst_18 = arith.constant dense<0.000000e+00> : vector<8x128xf32>
    %31 = tpu.matmul %28, %7, %cst_18 {dimension_numbers = #tpu.dot_dimension_numbers<[1], [0], [0], [1], [0, 0, 1, 1], [], []>} : vector<8x32xf32>, vector<32x128xf32>, vector<8x128xf32> -> vector<8x128xf32>
    %32 = arith.addf %30, %31 : vector<8x128xf32>
    %33 = vector.extract_strided_slice %32 {offsets = [0, 0], sizes = [8, 96], strides = [1, 1]} : vector<8x128xf32> to vector<8x96xf32>
    %34 = arith.negf %33 : vector<8x96xf32>
    %35 = math.exp %34 : vector<8x96xf32>
    %cst_19 = arith.constant 1.000000e+00 : f32
    %36 = vector.broadcast %cst_19 : f32 to vector<8x96xf32>
    %37 = arith.addf %36, %35 : vector<8x96xf32>
    %38 = arith.divf %36, %37 : vector<8x96xf32>
    %39 = vector.extract_strided_slice %32 {offsets = [0, 96], sizes = [8, 32], strides = [1, 1]} : vector<8x128xf32> to vector<8x32xf32>
    %40 = math.tanh %39 : vector<8x32xf32>
    %41 = vector.extract_strided_slice %38 {offsets = [0, 32], sizes = [8, 32], strides = [1, 1]} : vector<8x96xf32> to vector<8x32xf32>
    %42 = arith.mulf %41, %25 : vector<8x32xf32>
    %43 = vector.extract_strided_slice %38 {offsets = [0, 0], sizes = [8, 32], strides = [1, 1]} : vector<8x96xf32> to vector<8x32xf32>
    %44 = arith.mulf %43, %40 : vector<8x32xf32>
    %45 = arith.addf %42, %44 : vector<8x32xf32>
    %46 = vector.extract_strided_slice %38 {offsets = [0, 64], sizes = [8, 32], strides = [1, 1]} : vector<8x96xf32> to vector<8x32xf32>
    %47 = math.tanh %45 : vector<8x32xf32>
    %48 = arith.mulf %46, %47 : vector<8x32xf32>
    %c8_20 = arith.constant 8 : index
    %c0_21 = arith.constant 0 : index
    %49 = vector.load %arg11[%c8_20, %c0_21] : memref<64x32xf32, #tpu.memory_space<vmem>>, vector<8x32xf32>
    tpu.vector_store %arg11[%c8_20, %c0_21], %48 {strides = array<i32>} : memref<64x32xf32, #tpu.memory_space<vmem>>, vector<8x32xf32>,
    %c16 = arith.constant 16 : index
    %c0_22 = arith.constant 0 : index
    %50 = vector.load %arg10[%c16, %c0_22] : memref<64x128xf32, #tpu.memory_space<vmem>>, vector<8x128xf32>
    %cst_23 = arith.constant dense<0.000000e+00> : vector<8x128xf32>
    %51 = tpu.matmul %48, %7, %cst_23 {dimension_numbers = #tpu.dot_dimension_numbers<[1], [0], [0], [1], [0, 0, 1, 1], [], []>} : vector<8x32xf32>, vector<32x128xf32>, vector<8x128xf32> -> vector<8x128xf32>
    %52 = arith.addf %50, %51 : vector<8x128xf32>
    %53 = vector.extract_strided_slice %52 {offsets = [0, 0], sizes = [8, 96], strides = [1, 1]} : vector<8x128xf32> to vector<8x96xf32>
    %54 = arith.negf %53 : vector<8x96xf32>
    %55 = math.exp %54 : vector<8x96xf32>
    %cst_24 = arith.constant 1.000000e+00 : f32
    %56 = vector.broadcast %cst_24 : f32 to vector<8x96xf32>
    %57 = arith.addf %56, %55 : vector<8x96xf32>
    %58 = arith.divf %56, %57 : vector<8x96xf32>
    %59 = vector.extract_strided_slice %52 {offsets = [0, 96], sizes = [8, 32], strides = [1, 1]} : vector<8x128xf32> to vector<8x32xf32>
    %60 = math.tanh %59 : vector<8x32xf32>
    %61 = vector.extract_strided_slice %58 {offsets = [0, 32], sizes = [8, 32], strides = [1, 1]} : vector<8x96xf32> to vector<8x32xf32>
    %62 = arith.mulf %61, %45 : vector<8x32xf32>
    %63 = vector.extract_strided_slice %58 {offsets = [0, 0], sizes = [8, 32], strides = [1, 1]} : vector<8x96xf32> to vector<8x32xf32>
    %64 = arith.mulf %63, %60 : vector<8x32xf32>
    %65 = arith.addf %62, %64 : vector<8x32xf32>
    %66 = vector.extract_strided_slice %58 {offsets = [0, 64], sizes = [8, 32], strides = [1, 1]} : vector<8x96xf32> to vector<8x32xf32>
    %67 = math.tanh %65 : vector<8x32xf32>
    %68 = arith.mulf %66, %67 : vector<8x32xf32>
    %c16_25 = arith.constant 16 : index
    %c0_26 = arith.constant 0 : index
    %69 = vector.load %arg11[%c16_25, %c0_26] : memref<64x32xf32, #tpu.memory_space<vmem>>, vector<8x32xf32>
    tpu.vector_store %arg11[%c16_25, %c0_26], %68 {strides = array<i32>} : memref<64x32xf32, #tpu.memory_space<vmem>>, vector<8x32xf32>,
    %c24 = arith.constant 24 : index
    %c0_27 = arith.constant 0 : index
    %70 = vector.load %arg10[%c24, %c0_27] : memref<64x128xf32, #tpu.memory_space<vmem>>, vector<8x128xf32>
    %cst_28 = arith.constant dense<0.000000e+00> : vector<8x128xf32>
    %71 = tpu.matmul %68, %7, %cst_28 {dimension_numbers = #tpu.dot_dimension_numbers<[1], [0], [0], [1], [0, 0, 1, 1], [], []>} : vector<8x32xf32>, vector<32x128xf32>, vector<8x128xf32> -> vector<8x128xf32>
    %72 = arith.addf %70, %71 : vector<8x128xf32>
    %73 = vector.extract_strided_slice %72 {offsets = [0, 0], sizes = [8, 96], strides = [1, 1]} : vector<8x128xf32> to vector<8x96xf32>
    %74 = arith.negf %73 : vector<8x96xf32>
    %75 = math.exp %74 : vector<8x96xf32>
    %cst_29 = arith.constant 1.000000e+00 : f32
    %76 = vector.broadcast %cst_29 : f32 to vector<8x96xf32>
    %77 = arith.addf %76, %75 : vector<8x96xf32>
    %78 = arith.divf %76, %77 : vector<8x96xf32>
    %79 = vector.extract_strided_slice %72 {offsets = [0, 96], sizes = [8, 32], strides = [1, 1]} : vector<8x128xf32> to vector<8x32xf32>
    %80 = math.tanh %79 : vector<8x32xf32>
    %81 = vector.extract_strided_slice %78 {offsets = [0, 32], sizes = [8, 32], strides = [1, 1]} : vector<8x96xf32> to vector<8x32xf32>
    %82 = arith.mulf %81, %65 : vector<8x32xf32>
    %83 = vector.extract_strided_slice %78 {offsets = [0, 0], sizes = [8, 32], strides = [1, 1]} : vector<8x96xf32> to vector<8x32xf32>
    %84 = arith.mulf %83, %80 : vector<8x32xf32>
    %85 = arith.addf %82, %84 : vector<8x32xf32>
    %86 = vector.extract_strided_slice %78 {offsets = [0, 64], sizes = [8, 32], strides = [1, 1]} : vector<8x96xf32> to vector<8x32xf32>
    %87 = math.tanh %85 : vector<8x32xf32>
    %88 = arith.mulf %86, %87 : vector<8x32xf32>
    %c24_30 = arith.constant 24 : index
    %c0_31 = arith.constant 0 : index
    %89 = vector.load %arg11[%c24_30, %c0_31] : memref<64x32xf32, #tpu.memory_space<vmem>>, vector<8x32xf32>
    tpu.vector_store %arg11[%c24_30, %c0_31], %88 {strides = array<i32>} : memref<64x32xf32, #tpu.memory_space<vmem>>, vector<8x32xf32>,
    %c32 = arith.constant 32 : index
    %c0_32 = arith.constant 0 : index
    %90 = vector.load %arg10[%c32, %c0_32] : memref<64x128xf32, #tpu.memory_space<vmem>>, vector<8x128xf32>
    %cst_33 = arith.constant dense<0.000000e+00> : vector<8x128xf32>
    %91 = tpu.matmul %88, %7, %cst_33 {dimension_numbers = #tpu.dot_dimension_numbers<[1], [0], [0], [1], [0, 0, 1, 1], [], []>} : vector<8x32xf32>, vector<32x128xf32>, vector<8x128xf32> -> vector<8x128xf32>
    %92 = arith.addf %90, %91 : vector<8x128xf32>
    %93 = vector.extract_strided_slice %92 {offsets = [0, 0], sizes = [8, 96], strides = [1, 1]} : vector<8x128xf32> to vector<8x96xf32>
    %94 = arith.negf %93 : vector<8x96xf32>
    %95 = math.exp %94 : vector<8x96xf32>
    %cst_34 = arith.constant 1.000000e+00 : f32
    %96 = vector.broadcast %cst_34 : f32 to vector<8x96xf32>
    %97 = arith.addf %96, %95 : vector<8x96xf32>
    %98 = arith.divf %96, %97 : vector<8x96xf32>
    %99 = vector.extract_strided_slice %92 {offsets = [0, 96], sizes = [8, 32], strides = [1, 1]} : vector<8x128xf32> to vector<8x32xf32>
    %100 = math.tanh %99 : vector<8x32xf32>
    %101 = vector.extract_strided_slice %98 {offsets = [0, 32], sizes = [8, 32], strides = [1, 1]} : vector<8x96xf32> to vector<8x32xf32>
    %102 = arith.mulf %101, %85 : vector<8x32xf32>
    %103 = vector.extract_strided_slice %98 {offsets = [0, 0], sizes = [8, 32], strides = [1, 1]} : vector<8x96xf32> to vector<8x32xf32>
    %104 = arith.mulf %103, %100 : vector<8x32xf32>
    %105 = arith.addf %102, %104 : vector<8x32xf32>
    %106 = vector.extract_strided_slice %98 {offsets = [0, 64], sizes = [8, 32], strides = [1, 1]} : vector<8x96xf32> to vector<8x32xf32>
    %107 = math.tanh %105 : vector<8x32xf32>
    %108 = arith.mulf %106, %107 : vector<8x32xf32>
    %c32_35 = arith.constant 32 : index
    %c0_36 = arith.constant 0 : index
    %109 = vector.load %arg11[%c32_35, %c0_36] : memref<64x32xf32, #tpu.memory_space<vmem>>, vector<8x32xf32>
    tpu.vector_store %arg11[%c32_35, %c0_36], %108 {strides = array<i32>} : memref<64x32xf32, #tpu.memory_space<vmem>>, vector<8x32xf32>,
    %c40 = arith.constant 40 : index
    %c0_37 = arith.constant 0 : index
    %110 = vector.load %arg10[%c40, %c0_37] : memref<64x128xf32, #tpu.memory_space<vmem>>, vector<8x128xf32>
    %cst_38 = arith.constant dense<0.000000e+00> : vector<8x128xf32>
    %111 = tpu.matmul %108, %7, %cst_38 {dimension_numbers = #tpu.dot_dimension_numbers<[1], [0], [0], [1], [0, 0, 1, 1], [], []>} : vector<8x32xf32>, vector<32x128xf32>, vector<8x128xf32> -> vector<8x128xf32>
    %112 = arith.addf %110, %111 : vector<8x128xf32>
    %113 = vector.extract_strided_slice %112 {offsets = [0, 0], sizes = [8, 96], strides = [1, 1]} : vector<8x128xf32> to vector<8x96xf32>
    %114 = arith.negf %113 : vector<8x96xf32>
    %115 = math.exp %114 : vector<8x96xf32>
    %cst_39 = arith.constant 1.000000e+00 : f32
    %116 = vector.broadcast %cst_39 : f32 to vector<8x96xf32>
    %117 = arith.addf %116, %115 : vector<8x96xf32>
    %118 = arith.divf %116, %117 : vector<8x96xf32>
    %119 = vector.extract_strided_slice %112 {offsets = [0, 96], sizes = [8, 32], strides = [1, 1]} : vector<8x128xf32> to vector<8x32xf32>
    %120 = math.tanh %119 : vector<8x32xf32>
    %121 = vector.extract_strided_slice %118 {offsets = [0, 32], sizes = [8, 32], strides = [1, 1]} : vector<8x96xf32> to vector<8x32xf32>
    %122 = arith.mulf %121, %105 : vector<8x32xf32>
    %123 = vector.extract_strided_slice %118 {offsets = [0, 0], sizes = [8, 32], strides = [1, 1]} : vector<8x96xf32> to vector<8x32xf32>
    %124 = arith.mulf %123, %120 : vector<8x32xf32>
    %125 = arith.addf %122, %124 : vector<8x32xf32>
    %126 = vector.extract_strided_slice %118 {offsets = [0, 64], sizes = [8, 32], strides = [1, 1]} : vector<8x96xf32> to vector<8x32xf32>
    %127 = math.tanh %125 : vector<8x32xf32>
    %128 = arith.mulf %126, %127 : vector<8x32xf32>
    %c40_40 = arith.constant 40 : index
    %c0_41 = arith.constant 0 : index
    %129 = vector.load %arg11[%c40_40, %c0_41] : memref<64x32xf32, #tpu.memory_space<vmem>>, vector<8x32xf32>
    tpu.vector_store %arg11[%c40_40, %c0_41], %128 {strides = array<i32>} : memref<64x32xf32, #tpu.memory_space<vmem>>, vector<8x32xf32>,
    %c48 = arith.constant 48 : index
    %c0_42 = arith.constant 0 : index
    %130 = vector.load %arg10[%c48, %c0_42] : memref<64x128xf32, #tpu.memory_space<vmem>>, vector<8x128xf32>
    %cst_43 = arith.constant dense<0.000000e+00> : vector<8x128xf32>
    %131 = tpu.matmul %128, %7, %cst_43 {dimension_numbers = #tpu.dot_dimension_numbers<[1], [0], [0], [1], [0, 0, 1, 1], [], []>} : vector<8x32xf32>, vector<32x128xf32>, vector<8x128xf32> -> vector<8x128xf32>
    %132 = arith.addf %130, %131 : vector<8x128xf32>
    %133 = vector.extract_strided_slice %132 {offsets = [0, 0], sizes = [8, 96], strides = [1, 1]} : vector<8x128xf32> to vector<8x96xf32>
    %134 = arith.negf %133 : vector<8x96xf32>
    %135 = math.exp %134 : vector<8x96xf32>
    %cst_44 = arith.constant 1.000000e+00 : f32
    %136 = vector.broadcast %cst_44 : f32 to vector<8x96xf32>
    %137 = arith.addf %136, %135 : vector<8x96xf32>
    %138 = arith.divf %136, %137 : vector<8x96xf32>
    %139 = vector.extract_strided_slice %132 {offsets = [0, 96], sizes = [8, 32], strides = [1, 1]} : vector<8x128xf32> to vector<8x32xf32>
    %140 = math.tanh %139 : vector<8x32xf32>
    %141 = vector.extract_strided_slice %138 {offsets = [0, 32], sizes = [8, 32], strides = [1, 1]} : vector<8x96xf32> to vector<8x32xf32>
    %142 = arith.mulf %141, %125 : vector<8x32xf32>
    %143 = vector.extract_strided_slice %138 {offsets = [0, 0], sizes = [8, 32], strides = [1, 1]} : vector<8x96xf32> to vector<8x32xf32>
    %144 = arith.mulf %143, %140 : vector<8x32xf32>
    %145 = arith.addf %142, %144 : vector<8x32xf32>
    %146 = vector.extract_strided_slice %138 {offsets = [0, 64], sizes = [8, 32], strides = [1, 1]} : vector<8x96xf32> to vector<8x32xf32>
    %147 = math.tanh %145 : vector<8x32xf32>
    %148 = arith.mulf %146, %147 : vector<8x32xf32>
    %c48_45 = arith.constant 48 : index
    %c0_46 = arith.constant 0 : index
    %149 = vector.load %arg11[%c48_45, %c0_46] : memref<64x32xf32, #tpu.memory_space<vmem>>, vector<8x32xf32>
    tpu.vector_store %arg11[%c48_45, %c0_46], %148 {strides = array<i32>} : memref<64x32xf32, #tpu.memory_space<vmem>>, vector<8x32xf32>,
    %c56 = arith.constant 56 : index
    %c0_47 = arith.constant 0 : index
    %150 = vector.load %arg10[%c56, %c0_47] : memref<64x128xf32, #tpu.memory_space<vmem>>, vector<8x128xf32>
    %cst_48 = arith.constant dense<0.000000e+00> : vector<8x128xf32>
    %151 = tpu.matmul %148, %7, %cst_48 {dimension_numbers = #tpu.dot_dimension_numbers<[1], [0], [0], [1], [0, 0, 1, 1], [], []>} : vector<8x32xf32>, vector<32x128xf32>, vector<8x128xf32> -> vector<8x128xf32>
    %152 = arith.addf %150, %151 : vector<8x128xf32>
    %153 = vector.extract_strided_slice %152 {offsets = [0, 0], sizes = [8, 96], strides = [1, 1]} : vector<8x128xf32> to vector<8x96xf32>
    %154 = arith.negf %153 : vector<8x96xf32>
    %155 = math.exp %154 : vector<8x96xf32>
    %cst_49 = arith.constant 1.000000e+00 : f32
    %156 = vector.broadcast %cst_49 : f32 to vector<8x96xf32>
    %157 = arith.addf %156, %155 : vector<8x96xf32>
    %158 = arith.divf %156, %157 : vector<8x96xf32>
    %159 = vector.extract_strided_slice %152 {offsets = [0, 96], sizes = [8, 32], strides = [1, 1]} : vector<8x128xf32> to vector<8x32xf32>
    %160 = math.tanh %159 : vector<8x32xf32>
    %161 = vector.extract_strided_slice %158 {offsets = [0, 32], sizes = [8, 32], strides = [1, 1]} : vector<8x96xf32> to vector<8x32xf32>
    %162 = arith.mulf %161, %145 : vector<8x32xf32>
    %163 = vector.extract_strided_slice %158 {offsets = [0, 0], sizes = [8, 32], strides = [1, 1]} : vector<8x96xf32> to vector<8x32xf32>
    %164 = arith.mulf %163, %160 : vector<8x32xf32>
    %165 = arith.addf %162, %164 : vector<8x32xf32>
    %166 = vector.extract_strided_slice %158 {offsets = [0, 64], sizes = [8, 32], strides = [1, 1]} : vector<8x96xf32> to vector<8x32xf32>
    %167 = math.tanh %165 : vector<8x32xf32>
    %168 = arith.mulf %166, %167 : vector<8x32xf32>
    %c56_50 = arith.constant 56 : index
    %c0_51 = arith.constant 0 : index
    %169 = vector.load %arg11[%c56_50, %c0_51] : memref<64x32xf32, #tpu.memory_space<vmem>>, vector<8x32xf32>
    tpu.vector_store %arg11[%c56_50, %c0_51], %168 {strides = array<i32>} : memref<64x32xf32, #tpu.memory_space<vmem>>, vector<8x32xf32>,
    %c0_52 = arith.constant 0 : index
    %c0_53 = arith.constant 0 : index
    %170 = vector.load %arg11[%c0_52, %c0_53] : memref<64x32xf32, #tpu.memory_space<vmem>>, vector<64x32xf32>
    %c0_54 = arith.constant 0 : index
    %c0_55 = arith.constant 0 : index
    %171 = vector.load %arg4[%c0_54, %c0_55] : memref<32x128xf32, #tpu.memory_space<vmem>>, vector<32x128xf32>
    %cst_56 = arith.constant dense<0.000000e+00> : vector<64x128xf32>
    %172 = tpu.matmul %170, %171, %cst_56 {dimension_numbers = #tpu.dot_dimension_numbers<[1], [0], [0], [1], [0, 0, 1, 1], [], []>} : vector<64x32xf32>, vector<32x128xf32>, vector<64x128xf32> -> vector<64x128xf32>
    %c0_57 = arith.constant 0 : index
    %c0_58 = arith.constant 0 : index
    %173 = vector.load %arg6[%c0_57, %c0_58] : memref<1x128xf32, #tpu.memory_space<vmem>>, vector<1x128xf32>
    %174 = vector.broadcast %173 : vector<1x128xf32> to vector<64x128xf32>
    %175 = arith.addf %172, %174 : vector<64x128xf32>
    %c0_59 = arith.constant 0 : index
    %c0_60 = arith.constant 0 : index
    %176 = vector.load %arg10[%c0_59, %c0_60] : memref<64x128xf32, #tpu.memory_space<vmem>>, vector<64x128xf32>
    tpu.vector_store %arg10[%c0_59, %c0_60], %175 {strides = array<i32>} : memref<64x128xf32, #tpu.memory_space<vmem>>, vector<64x128xf32>,
    %c0_61 = arith.constant 0 : index
    %c0_62 = arith.constant 0 : index
    %177 = vector.load %arg5[%c0_61, %c0_62] : memref<32x128xf32, #tpu.memory_space<vmem>>, vector<32x128xf32>
    %cst_63 = arith.constant 0.000000e+00 : f32
    %178 = vector.broadcast %cst_63 : f32 to vector<8x32xf32>
    %cst_64 = arith.constant 0.000000e+00 : f32
    %179 = vector.broadcast %cst_64 : f32 to vector<8x32xf32>
    %c0_65 = arith.constant 0 : index
    %c0_66 = arith.constant 0 : index
    %180 = vector.load %arg10[%c0_65, %c0_66] : memref<64x128xf32, #tpu.memory_space<vmem>>, vector<8x128xf32>
    %cst_67 = arith.constant dense<0.000000e+00> : vector<8x128xf32>
    %181 = tpu.matmul %178, %177, %cst_67 {dimension_numbers = #tpu.dot_dimension_numbers<[1], [0], [0], [1], [0, 0, 1, 1], [], []>} : vector<8x32xf32>, vector<32x128xf32>, vector<8x128xf32> -> vector<8x128xf32>
    %182 = arith.addf %180, %181 : vector<8x128xf32>
    %183 = vector.extract_strided_slice %182 {offsets = [0, 0], sizes = [8, 96], strides = [1, 1]} : vector<8x128xf32> to vector<8x96xf32>
    %184 = arith.negf %183 : vector<8x96xf32>
    %185 = math.exp %184 : vector<8x96xf32>
    %cst_68 = arith.constant 1.000000e+00 : f32
    %186 = vector.broadcast %cst_68 : f32 to vector<8x96xf32>
    %187 = arith.addf %186, %185 : vector<8x96xf32>
    %188 = arith.divf %186, %187 : vector<8x96xf32>
    %189 = vector.extract_strided_slice %182 {offsets = [0, 96], sizes = [8, 32], strides = [1, 1]} : vector<8x128xf32> to vector<8x32xf32>
    %190 = math.tanh %189 : vector<8x32xf32>
    %191 = vector.extract_strided_slice %188 {offsets = [0, 32], sizes = [8, 32], strides = [1, 1]} : vector<8x96xf32> to vector<8x32xf32>
    %192 = arith.mulf %191, %179 : vector<8x32xf32>
    %193 = vector.extract_strided_slice %188 {offsets = [0, 0], sizes = [8, 32], strides = [1, 1]} : vector<8x96xf32> to vector<8x32xf32>
    %194 = arith.mulf %193, %190 : vector<8x32xf32>
    %195 = arith.addf %192, %194 : vector<8x32xf32>
    %196 = vector.extract_strided_slice %188 {offsets = [0, 64], sizes = [8, 32], strides = [1, 1]} : vector<8x96xf32> to vector<8x32xf32>
    %197 = math.tanh %195 : vector<8x32xf32>
    %198 = arith.mulf %196, %197 : vector<8x32xf32>
    %c8_69 = arith.constant 8 : index
    %c0_70 = arith.constant 0 : index
    %199 = vector.load %arg10[%c8_69, %c0_70] : memref<64x128xf32, #tpu.memory_space<vmem>>, vector<8x128xf32>
    %cst_71 = arith.constant dense<0.000000e+00> : vector<8x128xf32>
    %200 = tpu.matmul %198, %177, %cst_71 {dimension_numbers = #tpu.dot_dimension_numbers<[1], [0], [0], [1], [0, 0, 1, 1], [], []>} : vector<8x32xf32>, vector<32x128xf32>, vector<8x128xf32> -> vector<8x128xf32>
    %201 = arith.addf %199, %200 : vector<8x128xf32>
    %202 = vector.extract_strided_slice %201 {offsets = [0, 0], sizes = [8, 96], strides = [1, 1]} : vector<8x128xf32> to vector<8x96xf32>
    %203 = arith.negf %202 : vector<8x96xf32>
    %204 = math.exp %203 : vector<8x96xf32>
    %cst_72 = arith.constant 1.000000e+00 : f32
    %205 = vector.broadcast %cst_72 : f32 to vector<8x96xf32>
    %206 = arith.addf %205, %204 : vector<8x96xf32>
    %207 = arith.divf %205, %206 : vector<8x96xf32>
    %208 = vector.extract_strided_slice %201 {offsets = [0, 96], sizes = [8, 32], strides = [1, 1]} : vector<8x128xf32> to vector<8x32xf32>
    %209 = math.tanh %208 : vector<8x32xf32>
    %210 = vector.extract_strided_slice %207 {offsets = [0, 32], sizes = [8, 32], strides = [1, 1]} : vector<8x96xf32> to vector<8x32xf32>
    %211 = arith.mulf %210, %195 : vector<8x32xf32>
    %212 = vector.extract_strided_slice %207 {offsets = [0, 0], sizes = [8, 32], strides = [1, 1]} : vector<8x96xf32> to vector<8x32xf32>
    %213 = arith.mulf %212, %209 : vector<8x32xf32>
    %214 = arith.addf %211, %213 : vector<8x32xf32>
    %215 = vector.extract_strided_slice %207 {offsets = [0, 64], sizes = [8, 32], strides = [1, 1]} : vector<8x96xf32> to vector<8x32xf32>
    %216 = math.tanh %214 : vector<8x32xf32>
    %217 = arith.mulf %215, %216 : vector<8x32xf32>
    %c16_73 = arith.constant 16 : index
    %c0_74 = arith.constant 0 : index
    %218 = vector.load %arg10[%c16_73, %c0_74] : memref<64x128xf32, #tpu.memory_space<vmem>>, vector<8x128xf32>
    %cst_75 = arith.constant dense<0.000000e+00> : vector<8x128xf32>
    %219 = tpu.matmul %217, %177, %cst_75 {dimension_numbers = #tpu.dot_dimension_numbers<[1], [0], [0], [1], [0, 0, 1, 1], [], []>} : vector<8x32xf32>, vector<32x128xf32>, vector<8x128xf32> -> vector<8x128xf32>
    %220 = arith.addf %218, %219 : vector<8x128xf32>
    %221 = vector.extract_strided_slice %220 {offsets = [0, 0], sizes = [8, 96], strides = [1, 1]} : vector<8x128xf32> to vector<8x96xf32>
    %222 = arith.negf %221 : vector<8x96xf32>
    %223 = math.exp %222 : vector<8x96xf32>
    %cst_76 = arith.constant 1.000000e+00 : f32
    %224 = vector.broadcast %cst_76 : f32 to vector<8x96xf32>
    %225 = arith.addf %224, %223 : vector<8x96xf32>
    %226 = arith.divf %224, %225 : vector<8x96xf32>
    %227 = vector.extract_strided_slice %220 {offsets = [0, 96], sizes = [8, 32], strides = [1, 1]} : vector<8x128xf32> to vector<8x32xf32>
    %228 = math.tanh %227 : vector<8x32xf32>
    %229 = vector.extract_strided_slice %226 {offsets = [0, 32], sizes = [8, 32], strides = [1, 1]} : vector<8x96xf32> to vector<8x32xf32>
    %230 = arith.mulf %229, %214 : vector<8x32xf32>
    %231 = vector.extract_strided_slice %226 {offsets = [0, 0], sizes = [8, 32], strides = [1, 1]} : vector<8x96xf32> to vector<8x32xf32>
    %232 = arith.mulf %231, %228 : vector<8x32xf32>
    %233 = arith.addf %230, %232 : vector<8x32xf32>
    %234 = vector.extract_strided_slice %226 {offsets = [0, 64], sizes = [8, 32], strides = [1, 1]} : vector<8x96xf32> to vector<8x32xf32>
    %235 = math.tanh %233 : vector<8x32xf32>
    %236 = arith.mulf %234, %235 : vector<8x32xf32>
    %c24_77 = arith.constant 24 : index
    %c0_78 = arith.constant 0 : index
    %237 = vector.load %arg10[%c24_77, %c0_78] : memref<64x128xf32, #tpu.memory_space<vmem>>, vector<8x128xf32>
    %cst_79 = arith.constant dense<0.000000e+00> : vector<8x128xf32>
    %238 = tpu.matmul %236, %177, %cst_79 {dimension_numbers = #tpu.dot_dimension_numbers<[1], [0], [0], [1], [0, 0, 1, 1], [], []>} : vector<8x32xf32>, vector<32x128xf32>, vector<8x128xf32> -> vector<8x128xf32>
    %239 = arith.addf %237, %238 : vector<8x128xf32>
    %240 = vector.extract_strided_slice %239 {offsets = [0, 0], sizes = [8, 96], strides = [1, 1]} : vector<8x128xf32> to vector<8x96xf32>
    %241 = arith.negf %240 : vector<8x96xf32>
    %242 = math.exp %241 : vector<8x96xf32>
    %cst_80 = arith.constant 1.000000e+00 : f32
    %243 = vector.broadcast %cst_80 : f32 to vector<8x96xf32>
    %244 = arith.addf %243, %242 : vector<8x96xf32>
    %245 = arith.divf %243, %244 : vector<8x96xf32>
    %246 = vector.extract_strided_slice %239 {offsets = [0, 96], sizes = [8, 32], strides = [1, 1]} : vector<8x128xf32> to vector<8x32xf32>
    %247 = math.tanh %246 : vector<8x32xf32>
    %248 = vector.extract_strided_slice %245 {offsets = [0, 32], sizes = [8, 32], strides = [1, 1]} : vector<8x96xf32> to vector<8x32xf32>
    %249 = arith.mulf %248, %233 : vector<8x32xf32>
    %250 = vector.extract_strided_slice %245 {offsets = [0, 0], sizes = [8, 32], strides = [1, 1]} : vector<8x96xf32> to vector<8x32xf32>
    %251 = arith.mulf %250, %247 : vector<8x32xf32>
    %252 = arith.addf %249, %251 : vector<8x32xf32>
    %253 = vector.extract_strided_slice %245 {offsets = [0, 64], sizes = [8, 32], strides = [1, 1]} : vector<8x96xf32> to vector<8x32xf32>
    %254 = math.tanh %252 : vector<8x32xf32>
    %255 = arith.mulf %253, %254 : vector<8x32xf32>
    %c32_81 = arith.constant 32 : index
    %c0_82 = arith.constant 0 : index
    %256 = vector.load %arg10[%c32_81, %c0_82] : memref<64x128xf32, #tpu.memory_space<vmem>>, vector<8x128xf32>
    %cst_83 = arith.constant dense<0.000000e+00> : vector<8x128xf32>
    %257 = tpu.matmul %255, %177, %cst_83 {dimension_numbers = #tpu.dot_dimension_numbers<[1], [0], [0], [1], [0, 0, 1, 1], [], []>} : vector<8x32xf32>, vector<32x128xf32>, vector<8x128xf32> -> vector<8x128xf32>
    %258 = arith.addf %256, %257 : vector<8x128xf32>
    %259 = vector.extract_strided_slice %258 {offsets = [0, 0], sizes = [8, 96], strides = [1, 1]} : vector<8x128xf32> to vector<8x96xf32>
    %260 = arith.negf %259 : vector<8x96xf32>
    %261 = math.exp %260 : vector<8x96xf32>
    %cst_84 = arith.constant 1.000000e+00 : f32
    %262 = vector.broadcast %cst_84 : f32 to vector<8x96xf32>
    %263 = arith.addf %262, %261 : vector<8x96xf32>
    %264 = arith.divf %262, %263 : vector<8x96xf32>
    %265 = vector.extract_strided_slice %258 {offsets = [0, 96], sizes = [8, 32], strides = [1, 1]} : vector<8x128xf32> to vector<8x32xf32>
    %266 = math.tanh %265 : vector<8x32xf32>
    %267 = vector.extract_strided_slice %264 {offsets = [0, 32], sizes = [8, 32], strides = [1, 1]} : vector<8x96xf32> to vector<8x32xf32>
    %268 = arith.mulf %267, %252 : vector<8x32xf32>
    %269 = vector.extract_strided_slice %264 {offsets = [0, 0], sizes = [8, 32], strides = [1, 1]} : vector<8x96xf32> to vector<8x32xf32>
    %270 = arith.mulf %269, %266 : vector<8x32xf32>
    %271 = arith.addf %268, %270 : vector<8x32xf32>
    %272 = vector.extract_strided_slice %264 {offsets = [0, 64], sizes = [8, 32], strides = [1, 1]} : vector<8x96xf32> to vector<8x32xf32>
    %273 = math.tanh %271 : vector<8x32xf32>
    %274 = arith.mulf %272, %273 : vector<8x32xf32>
    %c40_85 = arith.constant 40 : index
    %c0_86 = arith.constant 0 : index
    %275 = vector.load %arg10[%c40_85, %c0_86] : memref<64x128xf32, #tpu.memory_space<vmem>>, vector<8x128xf32>
    %cst_87 = arith.constant dense<0.000000e+00> : vector<8x128xf32>
    %276 = tpu.matmul %274, %177, %cst_87 {dimension_numbers = #tpu.dot_dimension_numbers<[1], [0], [0], [1], [0, 0, 1, 1], [], []>} : vector<8x32xf32>, vector<32x128xf32>, vector<8x128xf32> -> vector<8x128xf32>
    %277 = arith.addf %275, %276 : vector<8x128xf32>
    %278 = vector.extract_strided_slice %277 {offsets = [0, 0], sizes = [8, 96], strides = [1, 1]} : vector<8x128xf32> to vector<8x96xf32>
    %279 = arith.negf %278 : vector<8x96xf32>
    %280 = math.exp %279 : vector<8x96xf32>
    %cst_88 = arith.constant 1.000000e+00 : f32
    %281 = vector.broadcast %cst_88 : f32 to vector<8x96xf32>
    %282 = arith.addf %281, %280 : vector<8x96xf32>
    %283 = arith.divf %281, %282 : vector<8x96xf32>
    %284 = vector.extract_strided_slice %277 {offsets = [0, 96], sizes = [8, 32], strides = [1, 1]} : vector<8x128xf32> to vector<8x32xf32>
    %285 = math.tanh %284 : vector<8x32xf32>
    %286 = vector.extract_strided_slice %283 {offsets = [0, 32], sizes = [8, 32], strides = [1, 1]} : vector<8x96xf32> to vector<8x32xf32>
    %287 = arith.mulf %286, %271 : vector<8x32xf32>
    %288 = vector.extract_strided_slice %283 {offsets = [0, 0], sizes = [8, 32], strides = [1, 1]} : vector<8x96xf32> to vector<8x32xf32>
    %289 = arith.mulf %288, %285 : vector<8x32xf32>
    %290 = arith.addf %287, %289 : vector<8x32xf32>
    %291 = vector.extract_strided_slice %283 {offsets = [0, 64], sizes = [8, 32], strides = [1, 1]} : vector<8x96xf32> to vector<8x32xf32>
    %292 = math.tanh %290 : vector<8x32xf32>
    %293 = arith.mulf %291, %292 : vector<8x32xf32>
    %c48_89 = arith.constant 48 : index
    %c0_90 = arith.constant 0 : index
    %294 = vector.load %arg10[%c48_89, %c0_90] : memref<64x128xf32, #tpu.memory_space<vmem>>, vector<8x128xf32>
    %cst_91 = arith.constant dense<0.000000e+00> : vector<8x128xf32>
    %295 = tpu.matmul %293, %177, %cst_91 {dimension_numbers = #tpu.dot_dimension_numbers<[1], [0], [0], [1], [0, 0, 1, 1], [], []>} : vector<8x32xf32>, vector<32x128xf32>, vector<8x128xf32> -> vector<8x128xf32>
    %296 = arith.addf %294, %295 : vector<8x128xf32>
    %297 = vector.extract_strided_slice %296 {offsets = [0, 0], sizes = [8, 96], strides = [1, 1]} : vector<8x128xf32> to vector<8x96xf32>
    %298 = arith.negf %297 : vector<8x96xf32>
    %299 = math.exp %298 : vector<8x96xf32>
    %cst_92 = arith.constant 1.000000e+00 : f32
    %300 = vector.broadcast %cst_92 : f32 to vector<8x96xf32>
    %301 = arith.addf %300, %299 : vector<8x96xf32>
    %302 = arith.divf %300, %301 : vector<8x96xf32>
    %303 = vector.extract_strided_slice %296 {offsets = [0, 96], sizes = [8, 32], strides = [1, 1]} : vector<8x128xf32> to vector<8x32xf32>
    %304 = math.tanh %303 : vector<8x32xf32>
    %305 = vector.extract_strided_slice %302 {offsets = [0, 32], sizes = [8, 32], strides = [1, 1]} : vector<8x96xf32> to vector<8x32xf32>
    %306 = arith.mulf %305, %290 : vector<8x32xf32>
    %307 = vector.extract_strided_slice %302 {offsets = [0, 0], sizes = [8, 32], strides = [1, 1]} : vector<8x96xf32> to vector<8x32xf32>
    %308 = arith.mulf %307, %304 : vector<8x32xf32>
    %309 = arith.addf %306, %308 : vector<8x32xf32>
    %310 = vector.extract_strided_slice %302 {offsets = [0, 64], sizes = [8, 32], strides = [1, 1]} : vector<8x96xf32> to vector<8x32xf32>
    %311 = math.tanh %309 : vector<8x32xf32>
    %312 = arith.mulf %310, %311 : vector<8x32xf32>
    %c56_93 = arith.constant 56 : index
    %c0_94 = arith.constant 0 : index
    %313 = vector.load %arg10[%c56_93, %c0_94] : memref<64x128xf32, #tpu.memory_space<vmem>>, vector<8x128xf32>
    %cst_95 = arith.constant dense<0.000000e+00> : vector<8x128xf32>
    %314 = tpu.matmul %312, %177, %cst_95 {dimension_numbers = #tpu.dot_dimension_numbers<[1], [0], [0], [1], [0, 0, 1, 1], [], []>} : vector<8x32xf32>, vector<32x128xf32>, vector<8x128xf32> -> vector<8x128xf32>
    %315 = arith.addf %313, %314 : vector<8x128xf32>
    %316 = vector.extract_strided_slice %315 {offsets = [0, 0], sizes = [8, 96], strides = [1, 1]} : vector<8x128xf32> to vector<8x96xf32>
    %317 = arith.negf %316 : vector<8x96xf32>
    %318 = math.exp %317 : vector<8x96xf32>
    %cst_96 = arith.constant 1.000000e+00 : f32
    %319 = vector.broadcast %cst_96 : f32 to vector<8x96xf32>
    %320 = arith.addf %319, %318 : vector<8x96xf32>
    %321 = arith.divf %319, %320 : vector<8x96xf32>
    %322 = vector.extract_strided_slice %315 {offsets = [0, 96], sizes = [8, 32], strides = [1, 1]} : vector<8x128xf32> to vector<8x32xf32>
    %323 = math.tanh %322 : vector<8x32xf32>
    %324 = vector.extract_strided_slice %321 {offsets = [0, 32], sizes = [8, 32], strides = [1, 1]} : vector<8x96xf32> to vector<8x32xf32>
    %325 = arith.mulf %324, %309 : vector<8x32xf32>
    %326 = vector.extract_strided_slice %321 {offsets = [0, 0], sizes = [8, 32], strides = [1, 1]} : vector<8x96xf32> to vector<8x32xf32>
    %327 = arith.mulf %326, %323 : vector<8x32xf32>
    %328 = arith.addf %325, %327 : vector<8x32xf32>
    %329 = vector.extract_strided_slice %321 {offsets = [0, 64], sizes = [8, 32], strides = [1, 1]} : vector<8x96xf32> to vector<8x32xf32>
    %330 = math.tanh %328 : vector<8x32xf32>
    %331 = arith.mulf %329, %330 : vector<8x32xf32>
    %c0_97 = arith.constant 0 : index
    %c0_98 = arith.constant 0 : index
    %332 = vector.load %arg7[%c0_97, %c0_98] : memref<32x128xf32, #tpu.memory_space<vmem>>, vector<32x128xf32>
    %cst_99 = arith.constant dense<0.000000e+00> : vector<8x128xf32>
    %333 = tpu.matmul %331, %332, %cst_99 {dimension_numbers = #tpu.dot_dimension_numbers<[1], [0], [0], [1], [0, 0, 1, 1], [], []>} : vector<8x32xf32>, vector<32x128xf32>, vector<8x128xf32> -> vector<8x128xf32>
    %c0_100 = arith.constant 0 : index
    %c0_101 = arith.constant 0 : index
    %334 = vector.load %arg8[%c0_100, %c0_101] : memref<1x128xf32, #tpu.memory_space<vmem>>, vector<1x128xf32>
    %335 = vector.broadcast %334 : vector<1x128xf32> to vector<8x128xf32>
    %336 = arith.addf %333, %335 : vector<8x128xf32>
    %c0_102 = arith.constant 0 : index
    %c0_103 = arith.constant 0 : index
    %337 = vector.load %arg9[%c0_102, %c0_103] : memref<8x128xf32, #tpu.memory_space<vmem>>, vector<8x128xf32>
    tpu.vector_store %arg9[%c0_102, %c0_103], %336 {strides = array<i32>} : memref<8x128xf32, #tpu.memory_space<vmem>>, vector<8x128xf32>,
    return
  }
}

</mosaic_0001>

<llo_original>
// kernel: tpu_custom_call.1
$region0: #{tpu_custom_call.1}
  #allocation0 [shape = 'u32[]', space=smem, size = 0x4, offset = 0x4, fixed_abs, tag = 'smem constant byte address 0x4 - core index']
  #allocation1 [shape = 'u32[144,128]{1,0:T(1,128)}', space=vmem, size = 0x12000, scoped, tag = 'internal scratch']
  #allocation2 [shape = 'f32[64,128]{1,0:T(8,128)}', space=vmem, size = 0x8000, scoped, tag = 'scratch operand']
  #allocation3 [shape = 'f32[64,32]{1,0:T(8,128)}', space=vmem, size = 0x8000, scoped, tag = 'scratch operand']
  %s0 = inlined_call_operand.vmem [shape: f32[64,10], index: 0, kind: input, shape index: {}]
  %s1 = inlined_call_operand.vmem [shape: f32[10,128], index: 1, kind: input, shape index: {}]
  %s2 = inlined_call_operand.vmem [shape: f32[32,128], index: 2, kind: input, shape index: {}]
  %s3 = inlined_call_operand.vmem [shape: f32[1,128], index: 3, kind: input, shape index: {}]
  %s4 = inlined_call_operand.vmem [shape: f32[32,128], index: 4, kind: input, shape index: {}]
  %s5 = inlined_call_operand.hbm [shape: f32[32,128], index: 5, kind: input, shape index: {}]
  %s6 = inlined_call_operand.vmem [shape: f32[1,128], index: 6, kind: input, shape index: {}]
  %s7 = inlined_call_operand.hbm [shape: f32[32,128], index: 7, kind: input, shape index: {}]
  %s8 = inlined_call_operand.vmem [shape: f32[1,128], index: 8, kind: input, shape index: {}]
  %s9 = inlined_call_operand.hbm [shape: f32[8,128], index: 9, kind: output, shape index: {}]
  %s10 = sld [smem:[#allocation0]]
  $region54: #{tpu_custom_call.1} parent=0
    _
  %s12 = ssub.s32 1, %s10
  %s13 = scalar_select 0, %s12, %s10
  $region1: #{tpu_custom_call.1} parent=0
    #allocation4 [shape = 'u8[16384]{0}', space=vmem, size = 0x4000, scoped, tag = 'input window, operand 5, single buffered']
    #allocation5 [shape = 's32[1]{0}', space=sflag, size = 0x4, scoped, tag = 'scoped memory for tpu_custom_call.1']
    #allocation6 [shape = 's32[1]{0}', space=sflag, size = 0x4, scoped, tag = 'scoped memory for tpu_custom_call.1']
    #allocation7 [shape = 'u8[16384]{0}', space=vmem, size = 0x4000, scoped, tag = 'input window, operand 7, single buffered']
    #allocation8 [shape = 's32[1]{0}', space=sflag, size = 0x4, scoped, tag = 'scoped memory for tpu_custom_call.1']
    #allocation9 [shape = 'u8[4096]{0}', space=vmem, size = 0x1000, scoped, tag = 'output window, operand 0, single buffered']
    %14 = vsyncpa [#allocation5], 0
    %15 = vsyncpa [#allocation8], 0
    %16 = vsyncpa [#allocation6], 0
    // Predicated region
    $region2: #{tpu_custom_call.1} parent=1 // pred_check
      _
    $region3: #{tpu_custom_call.1} parent=1 // pred_check_branch
      %18 = sbr.rel (0) target = $region5
    $region4: #{tpu_custom_call.1} parent=1 // pred_region
      _
    $region5: #{tpu_custom_call.1} parent=1 // pred_fallthru
      _
    // Predicated region
    $region6: #{tpu_custom_call.1} parent=1 // pred_check
      _
    $region7: #{tpu_custom_call.1} parent=1 // pred_check_branch
      %20 = sbr.rel (0) target = $region9
    $region8: #{tpu_custom_call.1} parent=1 // pred_region
      _
    $region9: #{tpu_custom_call.1} parent=1 // pred_fallthru
      _
    // Predicated region
    $region10: #{tpu_custom_call.1} parent=1 // pred_check
      _
    $region11: #{tpu_custom_call.1} parent=1 // pred_check_branch
      %22 = sbr.rel (0) target = $region13
    $region12: #{tpu_custom_call.1} parent=1 // pred_region
      _
    $region13: #{tpu_custom_call.1} parent=1 // pred_fallthru
      _
    // Predicated region
    $region14: #{tpu_custom_call.1} parent=1 // pred_check
      _
    $region15: #{tpu_custom_call.1} parent=1 // pred_check_branch
      %24 = sbr.rel (0) target = $region17
    $region16: #{tpu_custom_call.1} parent=1 // pred_region
      _
    $region17: #{tpu_custom_call.1} parent=1 // pred_fallthru
      _
    // Predicated region
    $region18: #{tpu_custom_call.1} parent=1 // pred_check
      _
    $region19: #{tpu_custom_call.1} parent=1 // pred_check_branch
      %26 = sbr.rel (0) target = $region21
    $region20: #{tpu_custom_call.1} parent=1 // pred_region
      _
    $region21: #{tpu_custom_call.1} parent=1 // pred_fallthru
      _
    // Predicated region
    $region22: #{tpu_custom_call.1} parent=1 // pred_check
      _
    $region23: #{tpu_custom_call.1} parent=1 // pred_check_branch
      %28 = sbr.rel (0) target = $region25
    $region24: #{tpu_custom_call.1} parent=1 // pred_region
      %s30 = ssub.s32 512, 512
      %31 = vsyncadd [#allocation5], %s30
      %s32 = sshll.u32 [#allocation4], 4
      %s33 = int_to_ptr.vmem [resolvable:$true] %s32
      %38 = dma.hbm_to_vmem [thread:$0]  %s5, 512, %s33, [#allocation5], 128, 128, 8
    $region25: #{tpu_custom_call.1} parent=1 // pred_fallthru
      _
    // Predicated region
    $region26: #{tpu_custom_call.1} parent=1 // pred_check
      _
    $region27: #{tpu_custom_call.1} parent=1 // pred_check_branch
      %40 = sbr.rel (0) target = $region29
    $region28: #{tpu_custom_call.1} parent=1 // pred_region
      _
    $region29: #{tpu_custom_call.1} parent=1 // pred_fallthru
      _
    // Predicated region
    $region30: #{tpu_custom_call.1} parent=1 // pred_check
      _
    $region31: #{tpu_custom_call.1} parent=1 // pred_check_branch
      %42 = sbr.rel (0) target = $region33
    $region32: #{tpu_custom_call.1} parent=1 // pred_region
      %s44 = ssub.s32 512, 512
      %45 = vsyncadd [#allocation8], %s44
      %s46 = sshll.u32 [#allocation7], 4
      %s47 = int_to_ptr.vmem [resolvable:$true] %s46
      %52 = dma.hbm_to_vmem [thread:$0]  %s7, 512, %s47, [#allocation8], 128, 128, 8
    $region33: #{tpu_custom_call.1} parent=1 // pred_fallthru
      _
    // Predicated region
    $region34: #{tpu_custom_call.1} parent=1 // pred_check
      _
    $region35: #{tpu_custom_call.1} parent=1 // pred_check_branch
      %54 = sbr.rel (0) target = $region37
    $region36: #{tpu_custom_call.1} parent=1 // pred_region
      _
    $region37: #{tpu_custom_call.1} parent=1 // pred_fallthru
      _
    // Predicated region
    $region38: #{tpu_custom_call.1} parent=1 // pred_check
      _
    $region39: #{tpu_custom_call.1} parent=1 // pred_check_branch
      %56 = sbr.rel (0) target = $region41
    $region40: #{tpu_custom_call.1} parent=1 // pred_region
      %57 = dma.done [#allocation5], 512
    $region41: #{tpu_custom_call.1} parent=1 // pred_fallthru
      _
    // Predicated region
    $region42: #{tpu_custom_call.1} parent=1 // pred_check
      _
    $region43: #{tpu_custom_call.1} parent=1 // pred_check_branch
      %59 = sbr.rel (0) target = $region45
    $region44: #{tpu_custom_call.1} parent=1 // pred_region
      %60 = dma.done [#allocation8], 512
    $region45: #{tpu_custom_call.1} parent=1 // pred_fallthru
      _
    %v61 = vld [vmem:[%s0] sm:$0xff]
    %v62 = vld [vmem:[%s0 + $0x8] sm:$0xff]
    %v63 = vld [vmem:[%s0 + $0x10] sm:$0xff]
    %v64 = vld [vmem:[%s0 + $0x18] sm:$0xff]
    %v65 = vld [vmem:[%s0 + $0x20] sm:$0xff]
    %v66 = vld [vmem:[%s0 + $0x28] sm:$0xff]
    %v67 = vld [vmem:[%s0 + $0x30] sm:$0xff]
    %v68 = vld [vmem:[%s0 + $0x38] sm:$0xff]
    %v69 = vld [vmem:[%s1] sm:$0xff]
    %v70 = vld [vmem:[%s1 + $0x8] sm:$0x3]
    %v71 = vld [vmem:[%s3] sm:$0x1]
    %v73 = vlaneseq
    %v74 = vshrl.u32 %v73, 7
    %v75 = vsub.s32 0, %v74
    %v76 = vrot.slane %v71, %v75
    %vm78 = vcmask 80896
    %v80 = vsel %vm78, %v61, 0
    %v83 = vsel %vm78, %v62, 0
    %v86 = vsel %vm78, %v63, 0
    %v89 = vsel %vm78, %v64, 0
    %v92 = vsel %vm78, %v65, 0
    %v95 = vsel %vm78, %v66, 0
    %v98 = vsel %vm78, %v67, 0
    %v101 = vsel %vm78, %v68, 0
    %vm103 = vcmask 1041408
    %v105 = vsel %vm103, %v70, 0
    %107 = vmatprep.subr.mxu0 0.0
    %108 = vmatpush1.msra.mxu0 0.0
    %109 = vmatprep.subr.mxu0 0.0
    %110 = vmatpush1.msra.mxu0 0.0
    %111 = vmatprep.subr.mxu0 0.0
    %112 = vmatpush1.msra.mxu0 0.0
    %113 = vmatprep.subr.mxu0 0.0
    %114 = vmatpush1.msra.mxu0 0.0
    %115 = vmatprep.subr.mxu0 0.0
    %116 = vmatpush1.msra.mxu0 0.0
    %117 = vmatprep.subr.mxu0 0.0
    %118 = vmatpush1.msra.mxu0 0.0
    %119 = vmatprep.subr.mxu0 0.0
    %120 = vmatpush1.msra.mxu0 0.0
    %121 = vmatprep.subr.mxu0 0.0
    %122 = vmatpush1.msra.mxu0 0.0
    %123 = vmatprep.subr.mxu0 0.0
    %124 = vmatpush1.msra.mxu0 0.0
    %125 = vmatprep.subr.mxu0 0.0
    %126 = vmatpush1.msra.mxu0 0.0
    %127 = vmatprep.subr.mxu0 0.0
    %128 = vmatpush1.msra.mxu0 0.0
    %129 = vmatprep.subr.mxu0 0.0
    %130 = vmatpush1.msra.mxu0 0.0
    %131 = vmatprep.subr.mxu0 0.0
    %132 = vmatpush1.msra.mxu0 0.0
    %133 = vmatprep.subr.mxu0 0.0
    %134 = vmatpush1.msra.mxu0 0.0
    %135 = vmatprep.subr.mxu0 0.0
    %136 = vmatpush1.msra.mxu0 %v105
    %137 = vmatprep.subr.mxu0 0.0
    %138 = vmatpush1.msra.mxu0 %v69
    %139 = vmatprep.subr.mxu0 0.0
    %140 = vmatpush2.msra.mxu0 0.0
    %141 = vmatprep.subr.mxu0 0.0
    %142 = vmatpush2.msra.mxu0 0.0
    %143 = vmatprep.subr.mxu0 0.0
    %144 = vmatpush2.msra.mxu0 0.0
    %145 = vmatprep.subr.mxu0 0.0
    %146 = vmatpush2.msra.mxu0 0.0
    %147 = vmatprep.subr.mxu0 0.0
    %148 = vmatpush2.msra.mxu0 0.0
    %149 = vmatprep.subr.mxu0 0.0
    %150 = vmatpush2.msra.mxu0 0.0
    %151 = vmatprep.subr.mxu0 0.0
    %152 = vmatpush2.msra.mxu0 0.0
    %153 = vmatprep.subr.mxu0 0.0
    %154 = vmatpush2.msra.mxu0 0.0
    %155 = vmatprep.subr.mxu0 0.0
    %156 = vmatpush2.msra.mxu0 0.0
    %157 = vmatprep.subr.mxu0 0.0
    %158 = vmatpush2.msra.mxu0 0.0
    %159 = vmatprep.subr.mxu0 0.0
    %160 = vmatpush2.msra.mxu0 0.0
    %161 = vmatprep.subr.mxu0 0.0
    %162 = vmatpush2.msra.mxu0 0.0
    %163 = vmatprep.subr.mxu0 0.0
    %164 = vmatpush2.msra.mxu0 0.0
    %165 = vmatprep.subr.mxu0 0.0
    %166 = vmatpush2.msra.mxu0 0.0
    %167 = vmatprep.subr.mxu0 0.0
    %168 = vmatpush2.msra.mxu0 0.0
    %169 = vmatprep.subr.mxu0 0.0
    %170 = vmatpush2.msra.mxu0 0.0
    %171 = vmatprep.mubr.f32.mxu0 0.0
    %172 = vmatmul.mubr.f32.gmra.mxu0 %v80
    %v173 = vpop.f32.mrf.mxu0
    %v174 = vadd.f32 %v76, %v173
    %v175 = vpop.f32.mrf.mxu0
    %176 = vmatprep.mubr.f32.mxu0 0.0
    %177 = vmatmul.mubr.f32.gmra.mxu0 %v83
    %v178 = vpop.f32.mrf.mxu0
    %v179 = vadd.f32 %v76, %v178
    %v180 = vpop.f32.mrf.mxu0
    %181 = vmatprep.mubr.f32.mxu0 0.0
    %182 = vmatmul.mubr.f32.gmra.mxu0 %v86
    %v183 = vpop.f32.mrf.mxu0
    %v184 = vadd.f32 %v76, %v183
    %v185 = vpop.f32.mrf.mxu0
    %186 = vmatprep.mubr.f32.mxu0 0.0
    %187 = vmatmul.mubr.f32.gmra.mxu0 %v89
    %v188 = vpop.f32.mrf.mxu0
    %v189 = vadd.f32 %v76, %v188
    %v190 = vpop.f32.mrf.mxu0
    %191 = vmatprep.mubr.f32.mxu0 0.0
    %192 = vmatmul.mubr.f32.gmra.mxu0 %v92
    %v193 = vpop.f32.mrf.mxu0
    %v194 = vadd.f32 %v76, %v193
    %v195 = vpop.f32.mrf.mxu0
    %196 = vmatprep.mubr.f32.mxu0 0.0
    %197 = vmatmul.mubr.f32.gmra.mxu0 %v95
    %v198 = vpop.f32.mrf.mxu0
    %v199 = vadd.f32 %v76, %v198
    %v200 = vpop.f32.mrf.mxu0
    %201 = vmatprep.mubr.f32.mxu0 0.0
    %202 = vmatmul.mubr.f32.gmra.mxu0 %v98
    %v203 = vpop.f32.mrf.mxu0
    %v204 = vadd.f32 %v76, %v203
    %v205 = vpop.f32.mrf.mxu0
    %206 = vmatprep.mubr.f32.mxu0 0.0
    %207 = vmatmul.mubr.f32.gmra.mxu0 %v101
    %v208 = vpop.f32.mrf.mxu0
    %v209 = vadd.f32 %v76, %v208
    %v210 = vpop.f32.mrf.mxu0
    %211 = vdwg.mxu0
    %212 = vst [vmem:[#allocation2] sm:$0xff] %v174
    %213 = vst [vmem:[#allocation2 + $0x8] sm:$0xff] %v179
    %214 = vst [vmem:[#allocation2 + $0x10] sm:$0xff] %v184
    %215 = vst [vmem:[#allocation2 + $0x18] sm:$0xff] %v189
    %216 = vst [vmem:[#allocation2 + $0x20] sm:$0xff] %v194
    %217 = vst [vmem:[#allocation2 + $0x28] sm:$0xff] %v199
    %218 = vst [vmem:[#allocation2 + $0x30] sm:$0xff] %v204
    %219 = vst [vmem:[#allocation2 + $0x38] sm:$0xff] %v209
    %v220 = vld [vmem:[%s2] sm:$0xff]
    %v221 = vld [vmem:[%s2 + $0x8] sm:$0xff]
    %v222 = vld [vmem:[%s2 + $0x10] sm:$0xff]
    %v223 = vld [vmem:[%s2 + $0x18] sm:$0xff]
    %v224 = vld [vmem:[#allocation2] sm:$0xff]
    %vm225 = vcmask 261120
    %v227 = vsel %vm225, 0.0, 0
    %229 = vmatprep.subr.mxu0 0.0
    %230 = vmatpush1.msra.mxu0 0.0
    %231 = vmatprep.subr.mxu0 0.0
    %232 = vmatpush1.msra.mxu0 0.0
    %233 = vmatprep.subr.mxu0 0.0
    %234 = vmatpush1.msra.mxu0 0.0
    %235 = vmatprep.subr.mxu0 0.0
    %236 = vmatpush1.msra.mxu0 0.0
    %237 = vmatprep.subr.mxu0 0.0
    %238 = vmatpush1.msra.mxu0 0.0
    %239 = vmatprep.subr.mxu0 0.0
    %240 = vmatpush1.msra.mxu0 0.0
    %241 = vmatprep.subr.mxu0 0.0
    %242 = vmatpush1.msra.mxu0 0.0
    %243 = vmatprep.subr.mxu0 0.0
    %244 = vmatpush1.msra.mxu0 0.0
    %245 = vmatprep.subr.mxu0 0.0
    %246 = vmatpush1.msra.mxu0 0.0
    %247 = vmatprep.subr.mxu0 0.0
    %248 = vmatpush1.msra.mxu0 0.0
    %249 = vmatprep.subr.mxu0 0.0
    %250 = vmatpush1.msra.mxu0 0.0
    %251 = vmatprep.subr.mxu0 0.0
    %252 = vmatpush1.msra.mxu0 0.0
    %253 = vmatprep.subr.mxu0 0.0
    %254 = vmatpush1.msra.mxu0 %v223
    %255 = vmatprep.subr.mxu0 0.0
    %256 = vmatpush1.msra.mxu0 %v222
    %257 = vmatprep.subr.mxu0 0.0
    %258 = vmatpush1.msra.mxu0 %v221
    %259 = vmatprep.subr.mxu0 0.0
    %260 = vmatpush1.msra.mxu0 %v220
    %261 = vmatprep.subr.mxu0 0.0
    %262 = vmatpush2.msra.mxu0 0.0
    %263 = vmatprep.subr.mxu0 0.0
    %264 = vmatpush2.msra.mxu0 0.0
    %265 = vmatprep.subr.mxu0 0.0
    %266 = vmatpush2.msra.mxu0 0.0
    %267 = vmatprep.subr.mxu0 0.0
    %268 = vmatpush2.msra.mxu0 0.0
    %269 = vmatprep.subr.mxu0 0.0
    %270 = vmatpush2.msra.mxu0 0.0
    %271 = vmatprep.subr.mxu0 0.0
    %272 = vmatpush2.msra.mxu0 0.0
    %273 = vmatprep.subr.mxu0 0.0
    %274 = vmatpush2.msra.mxu0 0.0
    %275 = vmatprep.subr.mxu0 0.0
    %276 = vmatpush2.msra.mxu0 0.0
    %277 = vmatprep.subr.mxu0 0.0
    %278 = vmatpush2.msra.mxu0 0.0
    %279 = vmatprep.subr.mxu0 0.0
    %280 = vmatpush2.msra.mxu0 0.0
    %281 = vmatprep.subr.mxu0 0.0
    %282 = vmatpush2.msra.mxu0 0.0
    %283 = vmatprep.subr.mxu0 0.0
    %284 = vmatpush2.msra.mxu0 0.0
    %285 = vmatprep.subr.mxu0 0.0
    %286 = vmatpush2.msra.mxu0 0.0
    %287 = vmatprep.subr.mxu0 0.0
    %288 = vmatpush2.msra.mxu0 0.0
    %289 = vmatprep.subr.mxu0 0.0
    %290 = vmatpush2.msra.mxu0 0.0
    %291 = vmatprep.subr.mxu0 0.0
    %292 = vmatpush2.msra.mxu0 0.0
    %293 = vmatprep.mubr.f32.mxu0 0.0
    %294 = vmatmul.mubr.f32.gmra.mxu0 %v227
    %v295 = vpop.f32.mrf.mxu0
    %v296 = vadd.f32 0.0, %v295
    %v297 = vpop.f32.mrf.mxu0
    %298 = vdwg.mxu0
    %v299 = vadd.f32 %v224, %v296
    %v300 = vxor.u32 %v299, 2147483648
    %v301 = vmul.f32 %v300, 1.442695
    %v302 = vpow.pop %v301
    %v303 = vadd.f32 %v302, 1.0
    %v304 = vrcp.pop %v303
    %v305 = vmul.f32 1.0, %v304
    %v306 = vtanh.pop %v299
    %v307 = vmul.f32 %v305, 0.0
    %309 = vrot.lane.b32.xlu0 %v306, 32
    %v310 = vpop.permute.xlu0 %309
    %v312 = vmul.f32 %v305, %v310
    %314 = vrot.lane.b32.xlu0 %v312, 32
    %v315 = vpop.permute.xlu0 %314
    %v317 = vadd.f32 %v307, %v315
    %v318 = vtanh.pop %v317
    %320 = vrot.lane.b32.xlu0 %v318, 32
    %v321 = vpop.permute.xlu0 %320
    %v323 = vmul.f32 %v305, %v321
    %325 = vrot.lane.b32.xlu0 %v323, 64
    %v326 = vpop.permute.xlu0 %325
    %328 = vst.msk [vmem:[#allocation3] sm:$0xff] %vm225, %v326
    %v329 = vld [vmem:[#allocation2 + $0x8] sm:$0xff]
    %v330 = vsel %vm225, %v326, 0
    %332 = vmatprep.subr.mxu0 0.0
    %333 = vmatpush1.msra.mxu0 0.0
    %334 = vmatprep.subr.mxu0 0.0
    %335 = vmatpush1.msra.mxu0 0.0
    %336 = vmatprep.subr.mxu0 0.0
    %337 = vmatpush1.msra.mxu0 0.0
    %338 = vmatprep.subr.mxu0 0.0
    %339 = vmatpush1.msra.mxu0 0.0
    %340 = vmatprep.subr.mxu0 0.0
    %341 = vmatpush1.msra.mxu0 0.0
    %342 = vmatprep.subr.mxu0 0.0
    %343 = vmatpush1.msra.mxu0 0.0
    %344 = vmatprep.subr.mxu0 0.0
    %345 = vmatpush1.msra.mxu0 0.0
    %346 = vmatprep.subr.mxu0 0.0
    %347 = vmatpush1.msra.mxu0 0.0
    %348 = vmatprep.subr.mxu0 0.0
    %349 = vmatpush1.msra.mxu0 0.0
    %350 = vmatprep.subr.mxu0 0.0
    %351 = vmatpush1.msra.mxu0 0.0
    %352 = vmatprep.subr.mxu0 0.0
    %353 = vmatpush1.msra.mxu0 0.0
    %354 = vmatprep.subr.mxu0 0.0
    %355 = vmatpush1.msra.mxu0 0.0
    %356 = vmatprep.subr.mxu0 0.0
    %357 = vmatpush1.msra.mxu0 %v223
    %358 = vmatprep.subr.mxu0 0.0
    %359 = vmatpush1.msra.mxu0 %v222
    %360 = vmatprep.subr.mxu0 0.0
    %361 = vmatpush1.msra.mxu0 %v221
    %362 = vmatprep.subr.mxu0 0.0
    %363 = vmatpush1.msra.mxu0 %v220
    %364 = vmatprep.subr.mxu0 0.0
    %365 = vmatpush2.msra.mxu0 0.0
    %366 = vmatprep.subr.mxu0 0.0
    %367 = vmatpush2.msra.mxu0 0.0
    %368 = vmatprep.subr.mxu0 0.0
    %369 = vmatpush2.msra.mxu0 0.0
    %370 = vmatprep.subr.mxu0 0.0
    %371 = vmatpush2.msra.mxu0 0.0
    %372 = vmatprep.subr.mxu0 0.0
    %373 = vmatpush2.msra.mxu0 0.0
    %374 = vmatprep.subr.mxu0 0.0
    %375 = vmatpush2.msra.mxu0 0.0
    %376 = vmatprep.subr.mxu0 0.0
    %377 = vmatpush2.msra.mxu0 0.0
    %378 = vmatprep.subr.mxu0 0.0
    %379 = vmatpush2.msra.mxu0 0.0
    %380 = vmatprep.subr.mxu0 0.0
    %381 = vmatpush2.msra.mxu0 0.0
    %382 = vmatprep.subr.mxu0 0.0
    %383 = vmatpush2.msra.mxu0 0.0
    %384 = vmatprep.subr.mxu0 0.0
    %385 = vmatpush2.msra.mxu0 0.0
    %386 = vmatprep.subr.mxu0 0.0
    %387 = vmatpush2.msra.mxu0 0.0
    %388 = vmatprep.subr.mxu0 0.0
    %389 = vmatpush2.msra.mxu0 0.0
    %390 = vmatprep.subr.mxu0 0.0
    %391 = vmatpush2.msra.mxu0 0.0
    %392 = vmatprep.subr.mxu0 0.0
    %393 = vmatpush2.msra.mxu0 0.0
    %394 = vmatprep.subr.mxu0 0.0
    %395 = vmatpush2.msra.mxu0 0.0
    %396 = vmatprep.mubr.f32.mxu0 0.0
    %397 = vmatmul.mubr.f32.gmra.mxu0 %v330
    %v398 = vpop.f32.mrf.mxu0
    %v399 = vadd.f32 0.0, %v398
    %v400 = vpop.f32.mrf.mxu0
    %401 = vdwg.mxu0
    %v402 = vadd.f32 %v329, %v399
    %v403 = vxor.u32 %v402, 2147483648
    %v404 = vmul.f32 %v403, 1.442695
    %v405 = vpow.pop %v404
    %v406 = vadd.f32 %v405, 1.0
    %v407 = vrcp.pop %v406
    %v408 = vmul.f32 1.0, %v407
    %v409 = vtanh.pop %v402
    %v410 = vmul.f32 %v408, %v317
    %412 = vrot.lane.b32.xlu0 %v409, 32
    %v413 = vpop.permute.xlu0 %412
    %v415 = vmul.f32 %v408, %v413
    %417 = vrot.lane.b32.xlu0 %v415, 32
    %v418 = vpop.permute.xlu0 %417
    %v420 = vadd.f32 %v410, %v418
    %v421 = vtanh.pop %v420
    %423 = vrot.lane.b32.xlu0 %v421, 32
    %v424 = vpop.permute.xlu0 %423
    %v426 = vmul.f32 %v408, %v424
    %428 = vrot.lane.b32.xlu0 %v426, 64
    %v429 = vpop.permute.xlu0 %428
    %431 = vst.msk [vmem:[#allocation3 + $0x8] sm:$0xff] %vm225, %v429
    %v432 = vld [vmem:[#allocation2 + $0x10] sm:$0xff]
    %v433 = vsel %vm225, %v429, 0
    %435 = vmatprep.subr.mxu0 0.0
    %436 = vmatpush1.msra.mxu0 0.0
    %437 = vmatprep.subr.mxu0 0.0
    %438 = vmatpush1.msra.mxu0 0.0
    %439 = vmatprep.subr.mxu0 0.0
    %440 = vmatpush1.msra.mxu0 0.0
    %441 = vmatprep.subr.mxu0 0.0
    %442 = vmatpush1.msra.mxu0 0.0
    %443 = vmatprep.subr.mxu0 0.0
    %444 = vmatpush1.msra.mxu0 0.0
    %445 = vmatprep.subr.mxu0 0.0
    %446 = vmatpush1.msra.mxu0 0.0
    %447 = vmatprep.subr.mxu0 0.0
    %448 = vmatpush1.msra.mxu0 0.0
    %449 = vmatprep.subr.mxu0 0.0
    %450 = vmatpush1.msra.mxu0 0.0
    %451 = vmatprep.subr.mxu0 0.0
    %452 = vmatpush1.msra.mxu0 0.0
    %453 = vmatprep.subr.mxu0 0.0
    %454 = vmatpush1.msra.mxu0 0.0
    %455 = vmatprep.subr.mxu0 0.0
    %456 = vmatpush1.msra.mxu0 0.0
    %457 = vmatprep.subr.mxu0 0.0
    %458 = vmatpush1.msra.mxu0 0.0
    %459 = vmatprep.subr.mxu0 0.0
    %460 = vmatpush1.msra.mxu0 %v223
    %461 = vmatprep.subr.mxu0 0.0
    %462 = vmatpush1.msra.mxu0 %v222
    %463 = vmatprep.subr.mxu0 0.0
    %464 = vmatpush1.msra.mxu0 %v221
    %465 = vmatprep.subr.mxu0 0.0
    %466 = vmatpush1.msra.mxu0 %v220
    %467 = vmatprep.subr.mxu0 0.0
    %468 = vmatpush2.msra.mxu0 0.0
    %469 = vmatprep.subr.mxu0 0.0
    %470 = vmatpush2.msra.mxu0 0.0
    %471 = vmatprep.subr.mxu0 0.0
    %472 = vmatpush2.msra.mxu0 0.0
    %473 = vmatprep.subr.mxu0 0.0
    %474 = vmatpush2.msra.mxu0 0.0
    %475 = vmatprep.subr.mxu0 0.0
    %476 = vmatpush2.msra.mxu0 0.0
    %477 = vmatprep.subr.mxu0 0.0
    %478 = vmatpush2.msra.mxu0 0.0
    %479 = vmatprep.subr.mxu0 0.0
    %480 = vmatpush2.msra.mxu0 0.0
    %481 = vmatprep.subr.mxu0 0.0
    %482 = vmatpush2.msra.mxu0 0.0
    %483 = vmatprep.subr.mxu0 0.0
    %484 = vmatpush2.msra.mxu0 0.0
    %485 = vmatprep.subr.mxu0 0.0
    %486 = vmatpush2.msra.mxu0 0.0
    %487 = vmatprep.subr.mxu0 0.0
    %488 = vmatpush2.msra.mxu0 0.0
    %489 = vmatprep.subr.mxu0 0.0
    %490 = vmatpush2.msra.mxu0 0.0
    %491 = vmatprep.subr.mxu0 0.0
    %492 = vmatpush2.msra.mxu0 0.0
    %493 = vmatprep.subr.mxu0 0.0
    %494 = vmatpush2.msra.mxu0 0.0
    %495 = vmatprep.subr.mxu0 0.0
    %496 = vmatpush2.msra.mxu0 0.0
    %497 = vmatprep.subr.mxu0 0.0
    %498 = vmatpush2.msra.mxu0 0.0
    %499 = vmatprep.mubr.f32.mxu0 0.0
    %500 = vmatmul.mubr.f32.gmra.mxu0 %v433
    %v501 = vpop.f32.mrf.mxu0
    %v502 = vadd.f32 0.0, %v501
    %v503 = vpop.f32.mrf.mxu0
    %504 = vdwg.mxu0
    %v505 = vadd.f32 %v432, %v502
    %v506 = vxor.u32 %v505, 2147483648
    %v507 = vmul.f32 %v506, 1.442695
    %v508 = vpow.pop %v507
    %v509 = vadd.f32 %v508, 1.0
    %v510 = vrcp.pop %v509
    %v511 = vmul.f32 1.0, %v510
    %v512 = vtanh.pop %v505
    %v513 = vmul.f32 %v511, %v420
    %515 = vrot.lane.b32.xlu0 %v512, 32
    %v516 = vpop.permute.xlu0 %515
    %v518 = vmul.f32 %v511, %v516
    %520 = vrot.lane.b32.xlu0 %v518, 32
    %v521 = vpop.permute.xlu0 %520
    %v523 = vadd.f32 %v513, %v521
    %v524 = vtanh.pop %v523
    %526 = vrot.lane.b32.xlu0 %v524, 32
    %v527 = vpop.permute.xlu0 %526
    %v529 = vmul.f32 %v511, %v527
    %531 = vrot.lane.b32.xlu0 %v529, 64
    %v532 = vpop.permute.xlu0 %531
    %534 = vst.msk [vmem:[#allocation3 + $0x10] sm:$0xff] %vm225, %v532
    %v535 = vld [vmem:[#allocation2 + $0x18] sm:$0xff]
    %v536 = vsel %vm225, %v532, 0
    %538 = vmatprep.subr.mxu0 0.0
    %539 = vmatpush1.msra.mxu0 0.0
    %540 = vmatprep.subr.mxu0 0.0
    %541 = vmatpush1.msra.mxu0 0.0
    %542 = vmatprep.subr.mxu0 0.0
    %543 = vmatpush1.msra.mxu0 0.0
    %544 = vmatprep.subr.mxu0 0.0
    %545 = vmatpush1.msra.mxu0 0.0
    %546 = vmatprep.subr.mxu0 0.0
    %547 = vmatpush1.msra.mxu0 0.0
    %548 = vmatprep.subr.mxu0 0.0
    %549 = vmatpush1.msra.mxu0 0.0
    %550 = vmatprep.subr.mxu0 0.0
    %551 = vmatpush1.msra.mxu0 0.0
    %552 = vmatprep.subr.mxu0 0.0
    %553 = vmatpush1.msra.mxu0 0.0
    %554 = vmatprep.subr.mxu0 0.0
    %555 = vmatpush1.msra.mxu0 0.0
    %556 = vmatprep.subr.mxu0 0.0
    %557 = vmatpush1.msra.mxu0 0.0
    %558 = vmatprep.subr.mxu0 0.0
    %559 = vmatpush1.msra.mxu0 0.0
    %560 = vmatprep.subr.mxu0 0.0
    %561 = vmatpush1.msra.mxu0 0.0
    %562 = vmatprep.subr.mxu0 0.0
    %563 = vmatpush1.msra.mxu0 %v223
    %564 = vmatprep.subr.mxu0 0.0
    %565 = vmatpush1.msra.mxu0 %v222
    %566 = vmatprep.subr.mxu0 0.0
    %567 = vmatpush1.msra.mxu0 %v221
    %568 = vmatprep.subr.mxu0 0.0
    %569 = vmatpush1.msra.mxu0 %v220
    %570 = vmatprep.subr.mxu0 0.0
    %571 = vmatpush2.msra.mxu0 0.0
    %572 = vmatprep.subr.mxu0 0.0
    %573 = vmatpush2.msra.mxu0 0.0
    %574 = vmatprep.subr.mxu0 0.0
    %575 = vmatpush2.msra.mxu0 0.0
    %576 = vmatprep.subr.mxu0 0.0
    %577 = vmatpush2.msra.mxu0 0.0
    %578 = vmatprep.subr.mxu0 0.0
    %579 = vmatpush2.msra.mxu0 0.0
    %580 = vmatprep.subr.mxu0 0.0
    %581 = vmatpush2.msra.mxu0 0.0
    %582 = vmatprep.subr.mxu0 0.0
    %583 = vmatpush2.msra.mxu0 0.0
    %584 = vmatprep.subr.mxu0 0.0
    %585 = vmatpush2.msra.mxu0 0.0
    %586 = vmatprep.subr.mxu0 0.0
    %587 = vmatpush2.msra.mxu0 0.0
    %588 = vmatprep.subr.mxu0 0.0
    %589 = vmatpush2.msra.mxu0 0.0
    %590 = vmatprep.subr.mxu0 0.0
    %591 = vmatpush2.msra.mxu0 0.0
    %592 = vmatprep.subr.mxu0 0.0
    %593 = vmatpush2.msra.mxu0 0.0
    %594 = vmatprep.subr.mxu0 0.0
    %595 = vmatpush2.msra.mxu0 0.0
    %596 = vmatprep.subr.mxu0 0.0
    %597 = vmatpush2.msra.mxu0 0.0
    %598 = vmatprep.subr.mxu0 0.0
    %599 = vmatpush2.msra.mxu0 0.0
    %600 = vmatprep.subr.mxu0 0.0
    %601 = vmatpush2.msra.mxu0 0.0
    %602 = vmatprep.mubr.f32.mxu0 0.0
    %603 = vmatmul.mubr.f32.gmra.mxu0 %v536
    %v604 = vpop.f32.mrf.mxu0
    %v605 = vadd.f32 0.0, %v604
    %v606 = vpop.f32.mrf.mxu0
    %607 = vdwg.mxu0
    %v608 = vadd.f32 %v535, %v605
    %v609 = vxor.u32 %v608, 2147483648
    %v610 = vmul.f32 %v609, 1.442695
    %v611 = vpow.pop %v610
    %v612 = vadd.f32 %v611, 1.0
    %v613 = vrcp.pop %v612
    %v614 = vmul.f32 1.0, %v613
    %v615 = vtanh.pop %v608
    %v616 = vmul.f32 %v614, %v523
    %618 = vrot.lane.b32.xlu0 %v615, 32
    %v619 = vpop.permute.xlu0 %618
    %v621 = vmul.f32 %v614, %v619
    %623 = vrot.lane.b32.xlu0 %v621, 32
    %v624 = vpop.permute.xlu0 %623
    %v626 = vadd.f32 %v616, %v624
    %v627 = vtanh.pop %v626
    %629 = vrot.lane.b32.xlu0 %v627, 32
    %v630 = vpop.permute.xlu0 %629
    %v632 = vmul.f32 %v614, %v630
    %634 = vrot.lane.b32.xlu0 %v632, 64
    %v635 = vpop.permute.xlu0 %634
    %637 = vst.msk [vmem:[#allocation3 + $0x18] sm:$0xff] %vm225, %v635
    %v638 = vld [vmem:[#allocation2 + $0x20] sm:$0xff]
    %v639 = vsel %vm225, %v635, 0
    %641 = vmatprep.subr.mxu0 0.0
    %642 = vmatpush1.msra.mxu0 0.0
    %643 = vmatprep.subr.mxu0 0.0
    %644 = vmatpush1.msra.mxu0 0.0
    %645 = vmatprep.subr.mxu0 0.0
    %646 = vmatpush1.msra.mxu0 0.0
    %647 = vmatprep.subr.mxu0 0.0
    %648 = vmatpush1.msra.mxu0 0.0
    %649 = vmatprep.subr.mxu0 0.0
    %650 = vmatpush1.msra.mxu0 0.0
    %651 = vmatprep.subr.mxu0 0.0
    %652 = vmatpush1.msra.mxu0 0.0
    %653 = vmatprep.subr.mxu0 0.0
    %654 = vmatpush1.msra.mxu0 0.0
    %655 = vmatprep.subr.mxu0 0.0
    %656 = vmatpush1.msra.mxu0 0.0
    %657 = vmatprep.subr.mxu0 0.0
    %658 = vmatpush1.msra.mxu0 0.0
    %659 = vmatprep.subr.mxu0 0.0
    %660 = vmatpush1.msra.mxu0 0.0
    %661 = vmatprep.subr.mxu0 0.0
    %662 = vmatpush1.msra.mxu0 0.0
    %663 = vmatprep.subr.mxu0 0.0
    %664 = vmatpush1.msra.mxu0 0.0
    %665 = vmatprep.subr.mxu0 0.0
    %666 = vmatpush1.msra.mxu0 %v223
    %667 = vmatprep.subr.mxu0 0.0
    %668 = vmatpush1.msra.mxu0 %v222
    %669 = vmatprep.subr.mxu0 0.0
    %670 = vmatpush1.msra.mxu0 %v221
    %671 = vmatprep.subr.mxu0 0.0
    %672 = vmatpush1.msra.mxu0 %v220
    %673 = vmatprep.subr.mxu0 0.0
    %674 = vmatpush2.msra.mxu0 0.0
    %675 = vmatprep.subr.mxu0 0.0
    %676 = vmatpush2.msra.mxu0 0.0
    %677 = vmatprep.subr.mxu0 0.0
    %678 = vmatpush2.msra.mxu0 0.0
    %679 = vmatprep.subr.mxu0 0.0
    %680 = vmatpush2.msra.mxu0 0.0
    %681 = vmatprep.subr.mxu0 0.0
    %682 = vmatpush2.msra.mxu0 0.0
    %683 = vmatprep.subr.mxu0 0.0
    %684 = vmatpush2.msra.mxu0 0.0
    %685 = vmatprep.subr.mxu0 0.0
    %686 = vmatpush2.msra.mxu0 0.0
    %687 = vmatprep.subr.mxu0 0.0
    %688 = vmatpush2.msra.mxu0 0.0
    %689 = vmatprep.subr.mxu0 0.0
    %690 = vmatpush2.msra.mxu0 0.0
    %691 = vmatprep.subr.mxu0 0.0
    %692 = vmatpush2.msra.mxu0 0.0
    %693 = vmatprep.subr.mxu0 0.0
    %694 = vmatpush2.msra.mxu0 0.0
    %695 = vmatprep.subr.mxu0 0.0
    %696 = vmatpush2.msra.mxu0 0.0
    %697 = vmatprep.subr.mxu0 0.0
    %698 = vmatpush2.msra.mxu0 0.0
    %699 = vmatprep.subr.mxu0 0.0
    %700 = vmatpush2.msra.mxu0 0.0
    %701 = vmatprep.subr.mxu0 0.0
    %702 = vmatpush2.msra.mxu0 0.0
    %703 = vmatprep.subr.mxu0 0.0
    %704 = vmatpush2.msra.mxu0 0.0
    %705 = vmatprep.mubr.f32.mxu0 0.0
    %706 = vmatmul.mubr.f32.gmra.mxu0 %v639
    %v707 = vpop.f32.mrf.mxu0
    %v708 = vadd.f32 0.0, %v707
    %v709 = vpop.f32.mrf.mxu0
    %710 = vdwg.mxu0
    %v711 = vadd.f32 %v638, %v708
    %v712 = vxor.u32 %v711, 2147483648
    %v713 = vmul.f32 %v712, 1.442695
    %v714 = vpow.pop %v713
    %v715 = vadd.f32 %v714, 1.0
    %v716 = vrcp.pop %v715
    %v717 = vmul.f32 1.0, %v716
    %v718 = vtanh.pop %v711
    %v719 = vmul.f32 %v717, %v626
    %721 = vrot.lane.b32.xlu0 %v718, 32
    %v722 = vpop.permute.xlu0 %721
    %v724 = vmul.f32 %v717, %v722
    %726 = vrot.lane.b32.xlu0 %v724, 32
    %v727 = vpop.permute.xlu0 %726
    %v729 = vadd.f32 %v719, %v727
    %v730 = vtanh.pop %v729
    %732 = vrot.lane.b32.xlu0 %v730, 32
    %v733 = vpop.permute.xlu0 %732
    %v735 = vmul.f32 %v717, %v733
    %737 = vrot.lane.b32.xlu0 %v735, 64
    %v738 = vpop.permute.xlu0 %737
    %740 = vst.msk [vmem:[#allocation3 + $0x20] sm:$0xff] %vm225, %v738
    %v741 = vld [vmem:[#allocation2 + $0x28] sm:$0xff]
    %v742 = vsel %vm225, %v738, 0
    %744 = vmatprep.subr.mxu0 0.0
    %745 = vmatpush1.msra.mxu0 0.0
    %746 = vmatprep.subr.mxu0 0.0
    %747 = vmatpush1.msra.mxu0 0.0
    %748 = vmatprep.subr.mxu0 0.0
    %749 = vmatpush1.msra.mxu0 0.0
    %750 = vmatprep.subr.mxu0 0.0
    %751 = vmatpush1.msra.mxu0 0.0
    %752 = vmatprep.subr.mxu0 0.0
    %753 = vmatpush1.msra.mxu0 0.0
    %754 = vmatprep.subr.mxu0 0.0
    %755 = vmatpush1.msra.mxu0 0.0
    %756 = vmatprep.subr.mxu0 0.0
    %757 = vmatpush1.msra.mxu0 0.0
    %758 = vmatprep.subr.mxu0 0.0
    %759 = vmatpush1.msra.mxu0 0.0
    %760 = vmatprep.subr.mxu0 0.0
    %761 = vmatpush1.msra.mxu0 0.0
    %762 = vmatprep.subr.mxu0 0.0
    %763 = vmatpush1.msra.mxu0 0.0
    %764 = vmatprep.subr.mxu0 0.0
    %765 = vmatpush1.msra.mxu0 0.0
    %766 = vmatprep.subr.mxu0 0.0
    %767 = vmatpush1.msra.mxu0 0.0
    %768 = vmatprep.subr.mxu0 0.0
    %769 = vmatpush1.msra.mxu0 %v223
    %770 = vmatprep.subr.mxu0 0.0
    %771 = vmatpush1.msra.mxu0 %v222
    %772 = vmatprep.subr.mxu0 0.0
    %773 = vmatpush1.msra.mxu0 %v221
    %774 = vmatprep.subr.mxu0 0.0
    %775 = vmatpush1.msra.mxu0 %v220
    %776 = vmatprep.subr.mxu0 0.0
    %777 = vmatpush2.msra.mxu0 0.0
    %778 = vmatprep.subr.mxu0 0.0
    %779 = vmatpush2.msra.mxu0 0.0
    %780 = vmatprep.subr.mxu0 0.0
    %781 = vmatpush2.msra.mxu0 0.0
    %782 = vmatprep.subr.mxu0 0.0
    %783 = vmatpush2.msra.mxu0 0.0
    %784 = vmatprep.subr.mxu0 0.0
    %785 = vmatpush2.msra.mxu0 0.0
    %786 = vmatprep.subr.mxu0 0.0
    %787 = vmatpush2.msra.mxu0 0.0
    %788 = vmatprep.subr.mxu0 0.0
    %789 = vmatpush2.msra.mxu0 0.0
    %790 = vmatprep.subr.mxu0 0.0
    %791 = vmatpush2.msra.mxu0 0.0
    %792 = vmatprep.subr.mxu0 0.0
    %793 = vmatpush2.msra.mxu0 0.0
    %794 = vmatprep.subr.mxu0 0.0
    %795 = vmatpush2.msra.mxu0 0.0
    %796 = vmatprep.subr.mxu0 0.0
    %797 = vmatpush2.msra.mxu0 0.0
    %798 = vmatprep.subr.mxu0 0.0
    %799 = vmatpush2.msra.mxu0 0.0
    %800 = vmatprep.subr.mxu0 0.0
    %801 = vmatpush2.msra.mxu0 0.0
    %802 = vmatprep.subr.mxu0 0.0
    %803 = vmatpush2.msra.mxu0 0.0
    %804 = vmatprep.subr.mxu0 0.0
    %805 = vmatpush2.msra.mxu0 0.0
    %806 = vmatprep.subr.mxu0 0.0
    %807 = vmatpush2.msra.mxu0 0.0
    %808 = vmatprep.mubr.f32.mxu0 0.0
    %809 = vmatmul.mubr.f32.gmra.mxu0 %v742
    %v810 = vpop.f32.mrf.mxu0
    %v811 = vadd.f32 0.0, %v810
    %v812 = vpop.f32.mrf.mxu0
    %813 = vdwg.mxu0
    %v814 = vadd.f32 %v741, %v811
    %v815 = vxor.u32 %v814, 2147483648
    %v816 = vmul.f32 %v815, 1.442695
    %v817 = vpow.pop %v816
    %v818 = vadd.f32 %v817, 1.0
    %v819 = vrcp.pop %v818
    %v820 = vmul.f32 1.0, %v819
    %v821 = vtanh.pop %v814
    %v822 = vmul.f32 %v820, %v729
    %824 = vrot.lane.b32.xlu0 %v821, 32
    %v825 = vpop.permute.xlu0 %824
    %v827 = vmul.f32 %v820, %v825
    %829 = vrot.lane.b32.xlu0 %v827, 32
    %v830 = vpop.permute.xlu0 %829
    %v832 = vadd.f32 %v822, %v830
    %v833 = vtanh.pop %v832
    %835 = vrot.lane.b32.xlu0 %v833, 32
    %v836 = vpop.permute.xlu0 %835
    %v838 = vmul.f32 %v820, %v836
    %840 = vrot.lane.b32.xlu0 %v838, 64
    %v841 = vpop.permute.xlu0 %840
    %843 = vst.msk [vmem:[#allocation3 + $0x28] sm:$0xff] %vm225, %v841
    %v844 = vld [vmem:[#allocation2 + $0x30] sm:$0xff]
    %v845 = vsel %vm225, %v841, 0
    %847 = vmatprep.subr.mxu0 0.0
    %848 = vmatpush1.msra.mxu0 0.0
    %849 = vmatprep.subr.mxu0 0.0
    %850 = vmatpush1.msra.mxu0 0.0
    %851 = vmatprep.subr.mxu0 0.0
    %852 = vmatpush1.msra.mxu0 0.0
    %853 = vmatprep.subr.mxu0 0.0
    %854 = vmatpush1.msra.mxu0 0.0
    %855 = vmatprep.subr.mxu0 0.0
    %856 = vmatpush1.msra.mxu0 0.0
    %857 = vmatprep.subr.mxu0 0.0
    %858 = vmatpush1.msra.mxu0 0.0
    %859 = vmatprep.subr.mxu0 0.0
    %860 = vmatpush1.msra.mxu0 0.0
    %861 = vmatprep.subr.mxu0 0.0
    %862 = vmatpush1.msra.mxu0 0.0
    %863 = vmatprep.subr.mxu0 0.0
    %864 = vmatpush1.msra.mxu0 0.0
    %865 = vmatprep.subr.mxu0 0.0
    %866 = vmatpush1.msra.mxu0 0.0
    %867 = vmatprep.subr.mxu0 0.0
    %868 = vmatpush1.msra.mxu0 0.0
    %869 = vmatprep.subr.mxu0 0.0
    %870 = vmatpush1.msra.mxu0 0.0
    %871 = vmatprep.subr.mxu0 0.0
    %872 = vmatpush1.msra.mxu0 %v223
    %873 = vmatprep.subr.mxu0 0.0
    %874 = vmatpush1.msra.mxu0 %v222
    %875 = vmatprep.subr.mxu0 0.0
    %876 = vmatpush1.msra.mxu0 %v221
    %877 = vmatprep.subr.mxu0 0.0
    %878 = vmatpush1.msra.mxu0 %v220
    %879 = vmatprep.subr.mxu0 0.0
    %880 = vmatpush2.msra.mxu0 0.0
    %881 = vmatprep.subr.mxu0 0.0
    %882 = vmatpush2.msra.mxu0 0.0
    %883 = vmatprep.subr.mxu0 0.0
    %884 = vmatpush2.msra.mxu0 0.0
    %885 = vmatprep.subr.mxu0 0.0
    %886 = vmatpush2.msra.mxu0 0.0
    %887 = vmatprep.subr.mxu0 0.0
    %888 = vmatpush2.msra.mxu0 0.0
    %889 = vmatprep.subr.mxu0 0.0
    %890 = vmatpush2.msra.mxu0 0.0
    %891 = vmatprep.subr.mxu0 0.0
    %892 = vmatpush2.msra.mxu0 0.0
    %893 = vmatprep.subr.mxu0 0.0
    %894 = vmatpush2.msra.mxu0 0.0
    %895 = vmatprep.subr.mxu0 0.0
    %896 = vmatpush2.msra.mxu0 0.0
    %897 = vmatprep.subr.mxu0 0.0
    %898 = vmatpush2.msra.mxu0 0.0
    %899 = vmatprep.subr.mxu0 0.0
    %900 = vmatpush2.msra.mxu0 0.0
    %901 = vmatprep.subr.mxu0 0.0
    %902 = vmatpush2.msra.mxu0 0.0
    %903 = vmatprep.subr.mxu0 0.0
    %904 = vmatpush2.msra.mxu0 0.0
    %905 = vmatprep.subr.mxu0 0.0
    %906 = vmatpush2.msra.mxu0 0.0
    %907 = vmatprep.subr.mxu0 0.0
    %908 = vmatpush2.msra.mxu0 0.0
    %909 = vmatprep.subr.mxu0 0.0
    %910 = vmatpush2.msra.mxu0 0.0
    %911 = vmatprep.mubr.f32.mxu0 0.0
    %912 = vmatmul.mubr.f32.gmra.mxu0 %v845
    %v913 = vpop.f32.mrf.mxu0
    %v914 = vadd.f32 0.0, %v913
    %v915 = vpop.f32.mrf.mxu0
    %916 = vdwg.mxu0
    %v917 = vadd.f32 %v844, %v914
    %v918 = vxor.u32 %v917, 2147483648
    %v919 = vmul.f32 %v918, 1.442695
    %v920 = vpow.pop %v919
    %v921 = vadd.f32 %v920, 1.0
    %v922 = vrcp.pop %v921
    %v923 = vmul.f32 1.0, %v922
    %v924 = vtanh.pop %v917
    %v925 = vmul.f32 %v923, %v832
    %927 = vrot.lane.b32.xlu0 %v924, 32
    %v928 = vpop.permute.xlu0 %927
    %v930 = vmul.f32 %v923, %v928
    %932 = vrot.lane.b32.xlu0 %v930, 32
    %v933 = vpop.permute.xlu0 %932
    %v935 = vadd.f32 %v925, %v933
    %v936 = vtanh.pop %v935
    %938 = vrot.lane.b32.xlu0 %v936, 32
    %v939 = vpop.permute.xlu0 %938
    %v941 = vmul.f32 %v923, %v939
    %943 = vrot.lane.b32.xlu0 %v941, 64
    %v944 = vpop.permute.xlu0 %943
    %946 = vst.msk [vmem:[#allocation3 + $0x30] sm:$0xff] %vm225, %v944
    %v947 = vld [vmem:[#allocation2 + $0x38] sm:$0xff]
    %v948 = vsel %vm225, %v944, 0
    %950 = vmatprep.subr.mxu0 0.0
    %951 = vmatpush1.msra.mxu0 0.0
    %952 = vmatprep.subr.mxu0 0.0
    %953 = vmatpush1.msra.mxu0 0.0
    %954 = vmatprep.subr.mxu0 0.0
    %955 = vmatpush1.msra.mxu0 0.0
    %956 = vmatprep.subr.mxu0 0.0
    %957 = vmatpush1.msra.mxu0 0.0
    %958 = vmatprep.subr.mxu0 0.0
    %959 = vmatpush1.msra.mxu0 0.0
    %960 = vmatprep.subr.mxu0 0.0
    %961 = vmatpush1.msra.mxu0 0.0
    %962 = vmatprep.subr.mxu0 0.0
    %963 = vmatpush1.msra.mxu0 0.0
    %964 = vmatprep.subr.mxu0 0.0
    %965 = vmatpush1.msra.mxu0 0.0
    %966 = vmatprep.subr.mxu0 0.0
    %967 = vmatpush1.msra.mxu0 0.0
    %968 = vmatprep.subr.mxu0 0.0
    %969 = vmatpush1.msra.mxu0 0.0
    %970 = vmatprep.subr.mxu0 0.0
    %971 = vmatpush1.msra.mxu0 0.0
    %972 = vmatprep.subr.mxu0 0.0
    %973 = vmatpush1.msra.mxu0 0.0
    %974 = vmatprep.subr.mxu0 0.0
    %975 = vmatpush1.msra.mxu0 %v223
    %976 = vmatprep.subr.mxu0 0.0
    %977 = vmatpush1.msra.mxu0 %v222
    %978 = vmatprep.subr.mxu0 0.0
    %979 = vmatpush1.msra.mxu0 %v221
    %980 = vmatprep.subr.mxu0 0.0
    %981 = vmatpush1.msra.mxu0 %v220
    %982 = vmatprep.subr.mxu0 0.0
    %983 = vmatpush2.msra.mxu0 0.0
    %984 = vmatprep.subr.mxu0 0.0
    %985 = vmatpush2.msra.mxu0 0.0
    %986 = vmatprep.subr.mxu0 0.0
    %987 = vmatpush2.msra.mxu0 0.0
    %988 = vmatprep.subr.mxu0 0.0
    %989 = vmatpush2.msra.mxu0 0.0
    %990 = vmatprep.subr.mxu0 0.0
    %991 = vmatpush2.msra.mxu0 0.0
    %992 = vmatprep.subr.mxu0 0.0
    %993 = vmatpush2.msra.mxu0 0.0
    %994 = vmatprep.subr.mxu0 0.0
    %995 = vmatpush2.msra.mxu0 0.0
    %996 = vmatprep.subr.mxu0 0.0
    %997 = vmatpush2.msra.mxu0 0.0
    %998 = vmatprep.subr.mxu0 0.0
    %999 = vmatpush2.msra.mxu0 0.0
    %1000 = vmatprep.subr.mxu0 0.0
    %1001 = vmatpush2.msra.mxu0 0.0
    %1002 = vmatprep.subr.mxu0 0.0
    %1003 = vmatpush2.msra.mxu0 0.0
    %1004 = vmatprep.subr.mxu0 0.0
    %1005 = vmatpush2.msra.mxu0 0.0
    %1006 = vmatprep.subr.mxu0 0.0
    %1007 = vmatpush2.msra.mxu0 0.0
    %1008 = vmatprep.subr.mxu0 0.0
    %1009 = vmatpush2.msra.mxu0 0.0
    %1010 = vmatprep.subr.mxu0 0.0
    %1011 = vmatpush2.msra.mxu0 0.0
    %1012 = vmatprep.subr.mxu0 0.0
    %1013 = vmatpush2.msra.mxu0 0.0
    %1014 = vmatprep.mubr.f32.mxu0 0.0
    %1015 = vmatmul.mubr.f32.gmra.mxu0 %v948
    %v1016 = vpop.f32.mrf.mxu0
    %v1017 = vadd.f32 0.0, %v1016
    %v1018 = vpop.f32.mrf.mxu0
    %1019 = vdwg.mxu0
    %v1020 = vadd.f32 %v947, %v1017
    %v1021 = vxor.u32 %v1020, 2147483648
    %v1022 = vmul.f32 %v1021, 1.442695
    %v1023 = vpow.pop %v1022
    %v1024 = vadd.f32 %v1023, 1.0
    %v1025 = vrcp.pop %v1024
    %v1026 = vmul.f32 1.0, %v1025
    %v1027 = vtanh.pop %v1020
    %v1028 = vmul.f32 %v1026, %v935
    %1030 = vrot.lane.b32.xlu0 %v1027, 32
    %v1031 = vpop.permute.xlu0 %1030
    %v1033 = vmul.f32 %v1026, %v1031
    %1035 = vrot.lane.b32.xlu0 %v1033, 32
    %v1036 = vpop.permute.xlu0 %1035
    %v1038 = vadd.f32 %v1028, %v1036
    %v1039 = vtanh.pop %v1038
    %1041 = vrot.lane.b32.xlu0 %v1039, 32
    %v1042 = vpop.permute.xlu0 %1041
    %v1044 = vmul.f32 %v1026, %v1042
    %1046 = vrot.lane.b32.xlu0 %v1044, 64
    %v1047 = vpop.permute.xlu0 %1046
    %1049 = vst.msk [vmem:[#allocation3 + $0x38] sm:$0xff] %vm225, %v1047
    %v1050 = vld [vmem:[#allocation3] sm:$0xff]
    %v1051 = vld [vmem:[#allocation3 + $0x8] sm:$0xff]
    %v1052 = vld [vmem:[#allocation3 + $0x10] sm:$0xff]
    %v1053 = vld [vmem:[#allocation3 + $0x18] sm:$0xff]
    %v1054 = vld [vmem:[#allocation3 + $0x20] sm:$0xff]
    %v1055 = vld [vmem:[#allocation3 + $0x28] sm:$0xff]
    %v1056 = vld [vmem:[#allocation3 + $0x30] sm:$0xff]
    %v1057 = vld [vmem:[#allocation3 + $0x38] sm:$0xff]
    %v1058 = vld [vmem:[%s4] sm:$0xff]
    %v1059 = vld [vmem:[%s4 + $0x8] sm:$0xff]
    %v1060 = vld [vmem:[%s4 + $0x10] sm:$0xff]
    %v1061 = vld [vmem:[%s4 + $0x18] sm:$0xff]
    %v1062 = vld [vmem:[%s6] sm:$0x1]
    %v1064 = vlaneseq
    %v1065 = vshrl.u32 %v1064, 7
    %v1066 = vsub.s32 0, %v1065
    %v1067 = vrot.slane %v1062, %v1066
    %v1070 = vsel %vm225, %v1050, 0
    %v1073 = vsel %vm225, %v1051, 0
    %v1076 = vsel %vm225, %v1052, 0
    %v1079 = vsel %vm225, %v1053, 0
    %v1082 = vsel %vm225, %v1054, 0
    %v1085 = vsel %vm225, %v1055, 0
    %v1088 = vsel %vm225, %v1056, 0
    %v1091 = vsel %vm225, %v1057, 0
    %1093 = vmatprep.subr.mxu0 0.0
    %1094 = vmatpush1.msra.mxu0 0.0
    %1095 = vmatprep.subr.mxu0 0.0
    %1096 = vmatpush1.msra.mxu0 0.0
    %1097 = vmatprep.subr.mxu0 0.0
    %1098 = vmatpush1.msra.mxu0 0.0
    %1099 = vmatprep.subr.mxu0 0.0
    %1100 = vmatpush1.msra.mxu0 0.0
    %1101 = vmatprep.subr.mxu0 0.0
    %1102 = vmatpush1.msra.mxu0 0.0
    %1103 = vmatprep.subr.mxu0 0.0
    %1104 = vmatpush1.msra.mxu0 0.0
    %1105 = vmatprep.subr.mxu0 0.0
    %1106 = vmatpush1.msra.mxu0 0.0
    %1107 = vmatprep.subr.mxu0 0.0
    %1108 = vmatpush1.msra.mxu0 0.0
    %1109 = vmatprep.subr.mxu0 0.0
    %1110 = vmatpush1.msra.mxu0 0.0
    %1111 = vmatprep.subr.mxu0 0.0
    %1112 = vmatpush1.msra.mxu0 0.0
    %1113 = vmatprep.subr.mxu0 0.0
    %1114 = vmatpush1.msra.mxu0 0.0
    %1115 = vmatprep.subr.mxu0 0.0
    %1116 = vmatpush1.msra.mxu0 0.0
    %1117 = vmatprep.subr.mxu0 0.0
    %1118 = vmatpush1.msra.mxu0 %v1061
    %1119 = vmatprep.subr.mxu0 0.0
    %1120 = vmatpush1.msra.mxu0 %v1060
    %1121 = vmatprep.subr.mxu0 0.0
    %1122 = vmatpush1.msra.mxu0 %v1059
    %1123 = vmatprep.subr.mxu0 0.0
    %1124 = vmatpush1.msra.mxu0 %v1058
    %1125 = vmatprep.subr.mxu0 0.0
    %1126 = vmatpush2.msra.mxu0 0.0
    %1127 = vmatprep.subr.mxu0 0.0
    %1128 = vmatpush2.msra.mxu0 0.0
    %1129 = vmatprep.subr.mxu0 0.0
    %1130 = vmatpush2.msra.mxu0 0.0
    %1131 = vmatprep.subr.mxu0 0.0
    %1132 = vmatpush2.msra.mxu0 0.0
    %1133 = vmatprep.subr.mxu0 0.0
    %1134 = vmatpush2.msra.mxu0 0.0
    %1135 = vmatprep.subr.mxu0 0.0
    %1136 = vmatpush2.msra.mxu0 0.0
    %1137 = vmatprep.subr.mxu0 0.0
    %1138 = vmatpush2.msra.mxu0 0.0
    %1139 = vmatprep.subr.mxu0 0.0
    %1140 = vmatpush2.msra.mxu0 0.0
    %1141 = vmatprep.subr.mxu0 0.0
    %1142 = vmatpush2.msra.mxu0 0.0
    %1143 = vmatprep.subr.mxu0 0.0
    %1144 = vmatpush2.msra.mxu0 0.0
    %1145 = vmatprep.subr.mxu0 0.0
    %1146 = vmatpush2.msra.mxu0 0.0
    %1147 = vmatprep.subr.mxu0 0.0
    %1148 = vmatpush2.msra.mxu0 0.0
    %1149 = vmatprep.subr.mxu0 0.0
    %1150 = vmatpush2.msra.mxu0 0.0
    %1151 = vmatprep.subr.mxu0 0.0
    %1152 = vmatpush2.msra.mxu0 0.0
    %1153 = vmatprep.subr.mxu0 0.0
    %1154 = vmatpush2.msra.mxu0 0.0
    %1155 = vmatprep.subr.mxu0 0.0
    %1156 = vmatpush2.msra.mxu0 0.0
    %1157 = vmatprep.mubr.f32.mxu0 0.0
    %1158 = vmatmul.mubr.f32.gmra.mxu0 %v1070
    %v1159 = vpop.f32.mrf.mxu0
    %v1160 = vadd.f32 %v1067, %v1159
    %v1161 = vpop.f32.mrf.mxu0
    %1162 = vmatprep.mubr.f32.mxu0 0.0
    %1163 = vmatmul.mubr.f32.gmra.mxu0 %v1073
    %v1164 = vpop.f32.mrf.mxu0
    %v1165 = vadd.f32 %v1067, %v1164
    %v1166 = vpop.f32.mrf.mxu0
    %1167 = vmatprep.mubr.f32.mxu0 0.0
    %1168 = vmatmul.mubr.f32.gmra.mxu0 %v1076
    %v1169 = vpop.f32.mrf.mxu0
    %v1170 = vadd.f32 %v1067, %v1169
    %v1171 = vpop.f32.mrf.mxu0
    %1172 = vmatprep.mubr.f32.mxu0 0.0
    %1173 = vmatmul.mubr.f32.gmra.mxu0 %v1079
    %v1174 = vpop.f32.mrf.mxu0
    %v1175 = vadd.f32 %v1067, %v1174
    %v1176 = vpop.f32.mrf.mxu0
    %1177 = vmatprep.mubr.f32.mxu0 0.0
    %1178 = vmatmul.mubr.f32.gmra.mxu0 %v1082
    %v1179 = vpop.f32.mrf.mxu0
    %v1180 = vadd.f32 %v1067, %v1179
    %v1181 = vpop.f32.mrf.mxu0
    %1182 = vmatprep.mubr.f32.mxu0 0.0
    %1183 = vmatmul.mubr.f32.gmra.mxu0 %v1085
    %v1184 = vpop.f32.mrf.mxu0
    %v1185 = vadd.f32 %v1067, %v1184
    %v1186 = vpop.f32.mrf.mxu0
    %1187 = vmatprep.mubr.f32.mxu0 0.0
    %1188 = vmatmul.mubr.f32.gmra.mxu0 %v1088
    %v1189 = vpop.f32.mrf.mxu0
    %v1190 = vadd.f32 %v1067, %v1189
    %v1191 = vpop.f32.mrf.mxu0
    %1192 = vmatprep.mubr.f32.mxu0 0.0
    %1193 = vmatmul.mubr.f32.gmra.mxu0 %v1091
    %v1194 = vpop.f32.mrf.mxu0
    %v1195 = vadd.f32 %v1067, %v1194
    %v1196 = vpop.f32.mrf.mxu0
    %1197 = vdwg.mxu0
    %1198 = vst [vmem:[#allocation2] sm:$0xff] %v1160
    %1199 = vst [vmem:[#allocation2 + $0x8] sm:$0xff] %v1165
    %1200 = vst [vmem:[#allocation2 + $0x10] sm:$0xff] %v1170
    %1201 = vst [vmem:[#allocation2 + $0x18] sm:$0xff] %v1175
    %1202 = vst [vmem:[#allocation2 + $0x20] sm:$0xff] %v1180
    %1203 = vst [vmem:[#allocation2 + $0x28] sm:$0xff] %v1185
    %1204 = vst [vmem:[#allocation2 + $0x30] sm:$0xff] %v1190
    %1205 = vst [vmem:[#allocation2 + $0x38] sm:$0xff] %v1195
    %v1206 = vld [vmem:[#allocation4] sm:$0xff]
    %v1207 = vld [vmem:[#allocation4 + $0x8] sm:$0xff]
    %v1208 = vld [vmem:[#allocation4 + $0x10] sm:$0xff]
    %v1209 = vld [vmem:[#allocation4 + $0x18] sm:$0xff]
    %v1210 = vld [vmem:[#allocation2] sm:$0xff]
    %1211 = vmatprep.subr.mxu0 0.0
    %1212 = vmatpush1.msra.mxu0 0.0
    %1213 = vmatprep.subr.mxu0 0.0
    %1214 = vmatpush1.msra.mxu0 0.0
    %1215 = vmatprep.subr.mxu0 0.0
    %1216 = vmatpush1.msra.mxu0 0.0
    %1217 = vmatprep.subr.mxu0 0.0
    %1218 = vmatpush1.msra.mxu0 0.0
    %1219 = vmatprep.subr.mxu0 0.0
    %1220 = vmatpush1.msra.mxu0 0.0
    %1221 = vmatprep.subr.mxu0 0.0
    %1222 = vmatpush1.msra.mxu0 0.0
    %1223 = vmatprep.subr.mxu0 0.0
    %1224 = vmatpush1.msra.mxu0 0.0
    %1225 = vmatprep.subr.mxu0 0.0
    %1226 = vmatpush1.msra.mxu0 0.0
    %1227 = vmatprep.subr.mxu0 0.0
    %1228 = vmatpush1.msra.mxu0 0.0
    %1229 = vmatprep.subr.mxu0 0.0
    %1230 = vmatpush1.msra.mxu0 0.0
    %1231 = vmatprep.subr.mxu0 0.0
    %1232 = vmatpush1.msra.mxu0 0.0
    %1233 = vmatprep.subr.mxu0 0.0
    %1234 = vmatpush1.msra.mxu0 0.0
    %1235 = vmatprep.subr.mxu0 0.0
    %1236 = vmatpush1.msra.mxu0 %v1209
    %1237 = vmatprep.subr.mxu0 0.0
    %1238 = vmatpush1.msra.mxu0 %v1208
    %1239 = vmatprep.subr.mxu0 0.0
    %1240 = vmatpush1.msra.mxu0 %v1207
    %1241 = vmatprep.subr.mxu0 0.0
    %1242 = vmatpush1.msra.mxu0 %v1206
    %1243 = vmatprep.subr.mxu0 0.0
    %1244 = vmatpush2.msra.mxu0 0.0
    %1245 = vmatprep.subr.mxu0 0.0
    %1246 = vmatpush2.msra.mxu0 0.0
    %1247 = vmatprep.subr.mxu0 0.0
    %1248 = vmatpush2.msra.mxu0 0.0
    %1249 = vmatprep.subr.mxu0 0.0
    %1250 = vmatpush2.msra.mxu0 0.0
    %1251 = vmatprep.subr.mxu0 0.0
    %1252 = vmatpush2.msra.mxu0 0.0
    %1253 = vmatprep.subr.mxu0 0.0
    %1254 = vmatpush2.msra.mxu0 0.0
    %1255 = vmatprep.subr.mxu0 0.0
    %1256 = vmatpush2.msra.mxu0 0.0
    %1257 = vmatprep.subr.mxu0 0.0
    %1258 = vmatpush2.msra.mxu0 0.0
    %1259 = vmatprep.subr.mxu0 0.0
    %1260 = vmatpush2.msra.mxu0 0.0
    %1261 = vmatprep.subr.mxu0 0.0
    %1262 = vmatpush2.msra.mxu0 0.0
    %1263 = vmatprep.subr.mxu0 0.0
    %1264 = vmatpush2.msra.mxu0 0.0
    %1265 = vmatprep.subr.mxu0 0.0
    %1266 = vmatpush2.msra.mxu0 0.0
    %1267 = vmatprep.subr.mxu0 0.0
    %1268 = vmatpush2.msra.mxu0 0.0
    %1269 = vmatprep.subr.mxu0 0.0
    %1270 = vmatpush2.msra.mxu0 0.0
    %1271 = vmatprep.subr.mxu0 0.0
    %1272 = vmatpush2.msra.mxu0 0.0
    %1273 = vmatprep.subr.mxu0 0.0
    %1274 = vmatpush2.msra.mxu0 0.0
    %1275 = vmatprep.mubr.f32.mxu0 0.0
    %1276 = vmatmul.mubr.f32.gmra.mxu0 %v227
    %v1277 = vpop.f32.mrf.mxu0
    %v1278 = vadd.f32 0.0, %v1277
    %v1279 = vpop.f32.mrf.mxu0
    %1280 = vdwg.mxu0
    %v1281 = vadd.f32 %v1210, %v1278
    %v1282 = vxor.u32 %v1281, 2147483648
    %v1283 = vmul.f32 %v1282, 1.442695
    %v1284 = vpow.pop %v1283
    %v1285 = vadd.f32 %v1284, 1.0
    %v1286 = vrcp.pop %v1285
    %v1287 = vmul.f32 1.0, %v1286
    %v1288 = vtanh.pop %v1281
    %v1289 = vmul.f32 %v1287, 0.0
    %1291 = vrot.lane.b32.xlu0 %v1288, 32
    %v1292 = vpop.permute.xlu0 %1291
    %v1294 = vmul.f32 %v1287, %v1292
    %1296 = vrot.lane.b32.xlu0 %v1294, 32
    %v1297 = vpop.permute.xlu0 %1296
    %v1299 = vadd.f32 %v1289, %v1297
    %v1300 = vtanh.pop %v1299
    %1302 = vrot.lane.b32.xlu0 %v1300, 32
    %v1303 = vpop.permute.xlu0 %1302
    %v1305 = vmul.f32 %v1287, %v1303
    %v1306 = vld [vmem:[#allocation2 + $0x8] sm:$0xff]
    %1308 = vrot.lane.b32.xlu0 %v1305, 64
    %v1309 = vpop.permute.xlu0 %1308
    %v1310 = vsel %vm225, %v1309, 0
    %1312 = vmatprep.subr.mxu0 0.0
    %1313 = vmatpush1.msra.mxu0 0.0
    %1314 = vmatprep.subr.mxu0 0.0
    %1315 = vmatpush1.msra.mxu0 0.0
    %1316 = vmatprep.subr.mxu0 0.0
    %1317 = vmatpush1.msra.mxu0 0.0
    %1318 = vmatprep.subr.mxu0 0.0
    %1319 = vmatpush1.msra.mxu0 0.0
    %1320 = vmatprep.subr.mxu0 0.0
    %1321 = vmatpush1.msra.mxu0 0.0
    %1322 = vmatprep.subr.mxu0 0.0
    %1323 = vmatpush1.msra.mxu0 0.0
    %1324 = vmatprep.subr.mxu0 0.0
    %1325 = vmatpush1.msra.mxu0 0.0
    %1326 = vmatprep.subr.mxu0 0.0
    %1327 = vmatpush1.msra.mxu0 0.0
    %1328 = vmatprep.subr.mxu0 0.0
    %1329 = vmatpush1.msra.mxu0 0.0
    %1330 = vmatprep.subr.mxu0 0.0
    %1331 = vmatpush1.msra.mxu0 0.0
    %1332 = vmatprep.subr.mxu0 0.0
    %1333 = vmatpush1.msra.mxu0 0.0
    %1334 = vmatprep.subr.mxu0 0.0
    %1335 = vmatpush1.msra.mxu0 0.0
    %1336 = vmatprep.subr.mxu0 0.0
    %1337 = vmatpush1.msra.mxu0 %v1209
    %1338 = vmatprep.subr.mxu0 0.0
    %1339 = vmatpush1.msra.mxu0 %v1208
    %1340 = vmatprep.subr.mxu0 0.0
    %1341 = vmatpush1.msra.mxu0 %v1207
    %1342 = vmatprep.subr.mxu0 0.0
    %1343 = vmatpush1.msra.mxu0 %v1206
    %1344 = vmatprep.subr.mxu0 0.0
    %1345 = vmatpush2.msra.mxu0 0.0
    %1346 = vmatprep.subr.mxu0 0.0
    %1347 = vmatpush2.msra.mxu0 0.0
    %1348 = vmatprep.subr.mxu0 0.0
    %1349 = vmatpush2.msra.mxu0 0.0
    %1350 = vmatprep.subr.mxu0 0.0
    %1351 = vmatpush2.msra.mxu0 0.0
    %1352 = vmatprep.subr.mxu0 0.0
    %1353 = vmatpush2.msra.mxu0 0.0
    %1354 = vmatprep.subr.mxu0 0.0
    %1355 = vmatpush2.msra.mxu0 0.0
    %1356 = vmatprep.subr.mxu0 0.0
    %1357 = vmatpush2.msra.mxu0 0.0
    %1358 = vmatprep.subr.mxu0 0.0
    %1359 = vmatpush2.msra.mxu0 0.0
    %1360 = vmatprep.subr.mxu0 0.0
    %1361 = vmatpush2.msra.mxu0 0.0
    %1362 = vmatprep.subr.mxu0 0.0
    %1363 = vmatpush2.msra.mxu0 0.0
    %1364 = vmatprep.subr.mxu0 0.0
    %1365 = vmatpush2.msra.mxu0 0.0
    %1366 = vmatprep.subr.mxu0 0.0
    %1367 = vmatpush2.msra.mxu0 0.0
    %1368 = vmatprep.subr.mxu0 0.0
    %1369 = vmatpush2.msra.mxu0 0.0
    %1370 = vmatprep.subr.mxu0 0.0
    %1371 = vmatpush2.msra.mxu0 0.0
    %1372 = vmatprep.subr.mxu0 0.0
    %1373 = vmatpush2.msra.mxu0 0.0
    %1374 = vmatprep.subr.mxu0 0.0
    %1375 = vmatpush2.msra.mxu0 0.0
    %1376 = vmatprep.mubr.f32.mxu0 0.0
    %1377 = vmatmul.mubr.f32.gmra.mxu0 %v1310
    %v1378 = vpop.f32.mrf.mxu0
    %v1379 = vadd.f32 0.0, %v1378
    %v1380 = vpop.f32.mrf.mxu0
    %1381 = vdwg.mxu0
    %v1382 = vadd.f32 %v1306, %v1379
    %v1383 = vxor.u32 %v1382, 2147483648
    %v1384 = vmul.f32 %v1383, 1.442695
    %v1385 = vpow.pop %v1384
    %v1386 = vadd.f32 %v1385, 1.0
    %v1387 = vrcp.pop %v1386
    %v1388 = vmul.f32 1.0, %v1387
    %v1389 = vtanh.pop %v1382
    %v1390 = vmul.f32 %v1388, %v1299
    %1392 = vrot.lane.b32.xlu0 %v1389, 32
    %v1393 = vpop.permute.xlu0 %1392
    %v1395 = vmul.f32 %v1388, %v1393
    %1397 = vrot.lane.b32.xlu0 %v1395, 32
    %v1398 = vpop.permute.xlu0 %1397
    %v1400 = vadd.f32 %v1390, %v1398
    %v1401 = vtanh.pop %v1400
    %1403 = vrot.lane.b32.xlu0 %v1401, 32
    %v1404 = vpop.permute.xlu0 %1403
    %v1406 = vmul.f32 %v1388, %v1404
    %v1407 = vld [vmem:[#allocation2 + $0x10] sm:$0xff]
    %1409 = vrot.lane.b32.xlu0 %v1406, 64
    %v1410 = vpop.permute.xlu0 %1409
    %v1411 = vsel %vm225, %v1410, 0
    %1413 = vmatprep.subr.mxu0 0.0
    %1414 = vmatpush1.msra.mxu0 0.0
    %1415 = vmatprep.subr.mxu0 0.0
    %1416 = vmatpush1.msra.mxu0 0.0
    %1417 = vmatprep.subr.mxu0 0.0
    %1418 = vmatpush1.msra.mxu0 0.0
    %1419 = vmatprep.subr.mxu0 0.0
    %1420 = vmatpush1.msra.mxu0 0.0
    %1421 = vmatprep.subr.mxu0 0.0
    %1422 = vmatpush1.msra.mxu0 0.0
    %1423 = vmatprep.subr.mxu0 0.0
    %1424 = vmatpush1.msra.mxu0 0.0
    %1425 = vmatprep.subr.mxu0 0.0
    %1426 = vmatpush1.msra.mxu0 0.0
    %1427 = vmatprep.subr.mxu0 0.0
    %1428 = vmatpush1.msra.mxu0 0.0
    %1429 = vmatprep.subr.mxu0 0.0
    %1430 = vmatpush1.msra.mxu0 0.0
    %1431 = vmatprep.subr.mxu0 0.0
    %1432 = vmatpush1.msra.mxu0 0.0
    %1433 = vmatprep.subr.mxu0 0.0
    %1434 = vmatpush1.msra.mxu0 0.0
    %1435 = vmatprep.subr.mxu0 0.0
    %1436 = vmatpush1.msra.mxu0 0.0
    %1437 = vmatprep.subr.mxu0 0.0
    %1438 = vmatpush1.msra.mxu0 %v1209
    %1439 = vmatprep.subr.mxu0 0.0
    %1440 = vmatpush1.msra.mxu0 %v1208
    %1441 = vmatprep.subr.mxu0 0.0
    %1442 = vmatpush1.msra.mxu0 %v1207
    %1443 = vmatprep.subr.mxu0 0.0
    %1444 = vmatpush1.msra.mxu0 %v1206
    %1445 = vmatprep.subr.mxu0 0.0
    %1446 = vmatpush2.msra.mxu0 0.0
    %1447 = vmatprep.subr.mxu0 0.0
    %1448 = vmatpush2.msra.mxu0 0.0
    %1449 = vmatprep.subr.mxu0 0.0
    %1450 = vmatpush2.msra.mxu0 0.0
    %1451 = vmatprep.subr.mxu0 0.0
    %1452 = vmatpush2.msra.mxu0 0.0
    %1453 = vmatprep.subr.mxu0 0.0
    %1454 = vmatpush2.msra.mxu0 0.0
    %1455 = vmatprep.subr.mxu0 0.0
    %1456 = vmatpush2.msra.mxu0 0.0
    %1457 = vmatprep.subr.mxu0 0.0
    %1458 = vmatpush2.msra.mxu0 0.0
    %1459 = vmatprep.subr.mxu0 0.0
    %1460 = vmatpush2.msra.mxu0 0.0
    %1461 = vmatprep.subr.mxu0 0.0
    %1462 = vmatpush2.msra.mxu0 0.0
    %1463 = vmatprep.subr.mxu0 0.0
    %1464 = vmatpush2.msra.mxu0 0.0
    %1465 = vmatprep.subr.mxu0 0.0
    %1466 = vmatpush2.msra.mxu0 0.0
    %1467 = vmatprep.subr.mxu0 0.0
    %1468 = vmatpush2.msra.mxu0 0.0
    %1469 = vmatprep.subr.mxu0 0.0
    %1470 = vmatpush2.msra.mxu0 0.0
    %1471 = vmatprep.subr.mxu0 0.0
    %1472 = vmatpush2.msra.mxu0 0.0
    %1473 = vmatprep.subr.mxu0 0.0
    %1474 = vmatpush2.msra.mxu0 0.0
    %1475 = vmatprep.subr.mxu0 0.0
    %1476 = vmatpush2.msra.mxu0 0.0
    %1477 = vmatprep.mubr.f32.mxu0 0.0
    %1478 = vmatmul.mubr.f32.gmra.mxu0 %v1411
    %v1479 = vpop.f32.mrf.mxu0
    %v1480 = vadd.f32 0.0, %v1479
    %v1481 = vpop.f32.mrf.mxu0
    %1482 = vdwg.mxu0
    %v1483 = vadd.f32 %v1407, %v1480
    %v1484 = vxor.u32 %v1483, 2147483648
    %v1485 = vmul.f32 %v1484, 1.442695
    %v1486 = vpow.pop %v1485
    %v1487 = vadd.f32 %v1486, 1.0
    %v1488 = vrcp.pop %v1487
    %v1489 = vmul.f32 1.0, %v1488
    %v1490 = vtanh.pop %v1483
    %v1491 = vmul.f32 %v1489, %v1400
    %1493 = vrot.lane.b32.xlu0 %v1490, 32
    %v1494 = vpop.permute.xlu0 %1493
    %v1496 = vmul.f32 %v1489, %v1494
    %1498 = vrot.lane.b32.xlu0 %v1496, 32
    %v1499 = vpop.permute.xlu0 %1498
    %v1501 = vadd.f32 %v1491, %v1499
    %v1502 = vtanh.pop %v1501
    %1504 = vrot.lane.b32.xlu0 %v1502, 32
    %v1505 = vpop.permute.xlu0 %1504
    %v1507 = vmul.f32 %v1489, %v1505
    %v1508 = vld [vmem:[#allocation2 + $0x18] sm:$0xff]
    %1510 = vrot.lane.b32.xlu0 %v1507, 64
    %v1511 = vpop.permute.xlu0 %1510
    %v1512 = vsel %vm225, %v1511, 0
    %1514 = vmatprep.subr.mxu0 0.0
    %1515 = vmatpush1.msra.mxu0 0.0
    %1516 = vmatprep.subr.mxu0 0.0
    %1517 = vmatpush1.msra.mxu0 0.0
    %1518 = vmatprep.subr.mxu0 0.0
    %1519 = vmatpush1.msra.mxu0 0.0
    %1520 = vmatprep.subr.mxu0 0.0
    %1521 = vmatpush1.msra.mxu0 0.0
    %1522 = vmatprep.subr.mxu0 0.0
    %1523 = vmatpush1.msra.mxu0 0.0
    %1524 = vmatprep.subr.mxu0 0.0
    %1525 = vmatpush1.msra.mxu0 0.0
    %1526 = vmatprep.subr.mxu0 0.0
    %1527 = vmatpush1.msra.mxu0 0.0
    %1528 = vmatprep.subr.mxu0 0.0
    %1529 = vmatpush1.msra.mxu0 0.0
    %1530 = vmatprep.subr.mxu0 0.0
    %1531 = vmatpush1.msra.mxu0 0.0
    %1532 = vmatprep.subr.mxu0 0.0
    %1533 = vmatpush1.msra.mxu0 0.0
    %1534 = vmatprep.subr.mxu0 0.0
    %1535 = vmatpush1.msra.mxu0 0.0
    %1536 = vmatprep.subr.mxu0 0.0
    %1537 = vmatpush1.msra.mxu0 0.0
    %1538 = vmatprep.subr.mxu0 0.0
    %1539 = vmatpush1.msra.mxu0 %v1209
    %1540 = vmatprep.subr.mxu0 0.0
    %1541 = vmatpush1.msra.mxu0 %v1208
    %1542 = vmatprep.subr.mxu0 0.0
    %1543 = vmatpush1.msra.mxu0 %v1207
    %1544 = vmatprep.subr.mxu0 0.0
    %1545 = vmatpush1.msra.mxu0 %v1206
    %1546 = vmatprep.subr.mxu0 0.0
    %1547 = vmatpush2.msra.mxu0 0.0
    %1548 = vmatprep.subr.mxu0 0.0
    %1549 = vmatpush2.msra.mxu0 0.0
    %1550 = vmatprep.subr.mxu0 0.0
    %1551 = vmatpush2.msra.mxu0 0.0
    %1552 = vmatprep.subr.mxu0 0.0
    %1553 = vmatpush2.msra.mxu0 0.0
    %1554 = vmatprep.subr.mxu0 0.0
    %1555 = vmatpush2.msra.mxu0 0.0
    %1556 = vmatprep.subr.mxu0 0.0
    %1557 = vmatpush2.msra.mxu0 0.0
    %1558 = vmatprep.subr.mxu0 0.0
    %1559 = vmatpush2.msra.mxu0 0.0
    %1560 = vmatprep.subr.mxu0 0.0
    %1561 = vmatpush2.msra.mxu0 0.0
    %1562 = vmatprep.subr.mxu0 0.0
    %1563 = vmatpush2.msra.mxu0 0.0
    %1564 = vmatprep.subr.mxu0 0.0
    %1565 = vmatpush2.msra.mxu0 0.0
    %1566 = vmatprep.subr.mxu0 0.0
    %1567 = vmatpush2.msra.mxu0 0.0
    %1568 = vmatprep.subr.mxu0 0.0
    %1569 = vmatpush2.msra.mxu0 0.0
    %1570 = vmatprep.subr.mxu0 0.0
    %1571 = vmatpush2.msra.mxu0 0.0
    %1572 = vmatprep.subr.mxu0 0.0
    %1573 = vmatpush2.msra.mxu0 0.0
    %1574 = vmatprep.subr.mxu0 0.0
    %1575 = vmatpush2.msra.mxu0 0.0
    %1576 = vmatprep.subr.mxu0 0.0
    %1577 = vmatpush2.msra.mxu0 0.0
    %1578 = vmatprep.mubr.f32.mxu0 0.0
    %1579 = vmatmul.mubr.f32.gmra.mxu0 %v1512
    %v1580 = vpop.f32.mrf.mxu0
    %v1581 = vadd.f32 0.0, %v1580
    %v1582 = vpop.f32.mrf.mxu0
    %1583 = vdwg.mxu0
    %v1584 = vadd.f32 %v1508, %v1581
    %v1585 = vxor.u32 %v1584, 2147483648
    %v1586 = vmul.f32 %v1585, 1.442695
    %v1587 = vpow.pop %v1586
    %v1588 = vadd.f32 %v1587, 1.0
    %v1589 = vrcp.pop %v1588
    %v1590 = vmul.f32 1.0, %v1589
    %v1591 = vtanh.pop %v1584
    %v1592 = vmul.f32 %v1590, %v1501
    %1594 = vrot.lane.b32.xlu0 %v1591, 32
    %v1595 = vpop.permute.xlu0 %1594
    %v1597 = vmul.f32 %v1590, %v1595
    %1599 = vrot.lane.b32.xlu0 %v1597, 32
    %v1600 = vpop.permute.xlu0 %1599
    %v1602 = vadd.f32 %v1592, %v1600
    %v1603 = vtanh.pop %v1602
    %1605 = vrot.lane.b32.xlu0 %v1603, 32
    %v1606 = vpop.permute.xlu0 %1605
    %v1608 = vmul.f32 %v1590, %v1606
    %v1609 = vld [vmem:[#allocation2 + $0x20] sm:$0xff]
    %1611 = vrot.lane.b32.xlu0 %v1608, 64
    %v1612 = vpop.permute.xlu0 %1611
    %v1613 = vsel %vm225, %v1612, 0
    %1615 = vmatprep.subr.mxu0 0.0
    %1616 = vmatpush1.msra.mxu0 0.0
    %1617 = vmatprep.subr.mxu0 0.0
    %1618 = vmatpush1.msra.mxu0 0.0
    %1619 = vmatprep.subr.mxu0 0.0
    %1620 = vmatpush1.msra.mxu0 0.0
    %1621 = vmatprep.subr.mxu0 0.0
    %1622 = vmatpush1.msra.mxu0 0.0
    %1623 = vmatprep.subr.mxu0 0.0
    %1624 = vmatpush1.msra.mxu0 0.0
    %1625 = vmatprep.subr.mxu0 0.0
    %1626 = vmatpush1.msra.mxu0 0.0
    %1627 = vmatprep.subr.mxu0 0.0
    %1628 = vmatpush1.msra.mxu0 0.0
    %1629 = vmatprep.subr.mxu0 0.0
    %1630 = vmatpush1.msra.mxu0 0.0
    %1631 = vmatprep.subr.mxu0 0.0
    %1632 = vmatpush1.msra.mxu0 0.0
    %1633 = vmatprep.subr.mxu0 0.0
    %1634 = vmatpush1.msra.mxu0 0.0
    %1635 = vmatprep.subr.mxu0 0.0
    %1636 = vmatpush1.msra.mxu0 0.0
    %1637 = vmatprep.subr.mxu0 0.0
    %1638 = vmatpush1.msra.mxu0 0.0
    %1639 = vmatprep.subr.mxu0 0.0
    %1640 = vmatpush1.msra.mxu0 %v1209
    %1641 = vmatprep.subr.mxu0 0.0
    %1642 = vmatpush1.msra.mxu0 %v1208
    %1643 = vmatprep.subr.mxu0 0.0
    %1644 = vmatpush1.msra.mxu0 %v1207
    %1645 = vmatprep.subr.mxu0 0.0
    %1646 = vmatpush1.msra.mxu0 %v1206
    %1647 = vmatprep.subr.mxu0 0.0
    %1648 = vmatpush2.msra.mxu0 0.0
    %1649 = vmatprep.subr.mxu0 0.0
    %1650 = vmatpush2.msra.mxu0 0.0
    %1651 = vmatprep.subr.mxu0 0.0
    %1652 = vmatpush2.msra.mxu0 0.0
    %1653 = vmatprep.subr.mxu0 0.0
    %1654 = vmatpush2.msra.mxu0 0.0
    %1655 = vmatprep.subr.mxu0 0.0
    %1656 = vmatpush2.msra.mxu0 0.0
    %1657 = vmatprep.subr.mxu0 0.0
    %1658 = vmatpush2.msra.mxu0 0.0
    %1659 = vmatprep.subr.mxu0 0.0
    %1660 = vmatpush2.msra.mxu0 0.0
    %1661 = vmatprep.subr.mxu0 0.0
    %1662 = vmatpush2.msra.mxu0 0.0
    %1663 = vmatprep.subr.mxu0 0.0
    %1664 = vmatpush2.msra.mxu0 0.0
    %1665 = vmatprep.subr.mxu0 0.0
    %1666 = vmatpush2.msra.mxu0 0.0
    %1667 = vmatprep.subr.mxu0 0.0
    %1668 = vmatpush2.msra.mxu0 0.0
    %1669 = vmatprep.subr.mxu0 0.0
    %1670 = vmatpush2.msra.mxu0 0.0
    %1671 = vmatprep.subr.mxu0 0.0
    %1672 = vmatpush2.msra.mxu0 0.0
    %1673 = vmatprep.subr.mxu0 0.0
    %1674 = vmatpush2.msra.mxu0 0.0
    %1675 = vmatprep.subr.mxu0 0.0
    %1676 = vmatpush2.msra.mxu0 0.0
    %1677 = vmatprep.subr.mxu0 0.0
    %1678 = vmatpush2.msra.mxu0 0.0
    %1679 = vmatprep.mubr.f32.mxu0 0.0
    %1680 = vmatmul.mubr.f32.gmra.mxu0 %v1613
    %v1681 = vpop.f32.mrf.mxu0
    %v1682 = vadd.f32 0.0, %v1681
    %v1683 = vpop.f32.mrf.mxu0
    %1684 = vdwg.mxu0
    %v1685 = vadd.f32 %v1609, %v1682
    %v1686 = vxor.u32 %v1685, 2147483648
    %v1687 = vmul.f32 %v1686, 1.442695
    %v1688 = vpow.pop %v1687
    %v1689 = vadd.f32 %v1688, 1.0
    %v1690 = vrcp.pop %v1689
    %v1691 = vmul.f32 1.0, %v1690
    %v1692 = vtanh.pop %v1685
    %v1693 = vmul.f32 %v1691, %v1602
    %1695 = vrot.lane.b32.xlu0 %v1692, 32
    %v1696 = vpop.permute.xlu0 %1695
    %v1698 = vmul.f32 %v1691, %v1696
    %1700 = vrot.lane.b32.xlu0 %v1698, 32
    %v1701 = vpop.permute.xlu0 %1700
    %v1703 = vadd.f32 %v1693, %v1701
    %v1704 = vtanh.pop %v1703
    %1706 = vrot.lane.b32.xlu0 %v1704, 32
    %v1707 = vpop.permute.xlu0 %1706
    %v1709 = vmul.f32 %v1691, %v1707
    %v1710 = vld [vmem:[#allocation2 + $0x28] sm:$0xff]
    %1712 = vrot.lane.b32.xlu0 %v1709, 64
    %v1713 = vpop.permute.xlu0 %1712
    %v1714 = vsel %vm225, %v1713, 0
    %1716 = vmatprep.subr.mxu0 0.0
    %1717 = vmatpush1.msra.mxu0 0.0
    %1718 = vmatprep.subr.mxu0 0.0
    %1719 = vmatpush1.msra.mxu0 0.0
    %1720 = vmatprep.subr.mxu0 0.0
    %1721 = vmatpush1.msra.mxu0 0.0
    %1722 = vmatprep.subr.mxu0 0.0
    %1723 = vmatpush1.msra.mxu0 0.0
    %1724 = vmatprep.subr.mxu0 0.0
    %1725 = vmatpush1.msra.mxu0 0.0
    %1726 = vmatprep.subr.mxu0 0.0
    %1727 = vmatpush1.msra.mxu0 0.0
    %1728 = vmatprep.subr.mxu0 0.0
    %1729 = vmatpush1.msra.mxu0 0.0
    %1730 = vmatprep.subr.mxu0 0.0
    %1731 = vmatpush1.msra.mxu0 0.0
    %1732 = vmatprep.subr.mxu0 0.0
    %1733 = vmatpush1.msra.mxu0 0.0
    %1734 = vmatprep.subr.mxu0 0.0
    %1735 = vmatpush1.msra.mxu0 0.0
    %1736 = vmatprep.subr.mxu0 0.0
    %1737 = vmatpush1.msra.mxu0 0.0
    %1738 = vmatprep.subr.mxu0 0.0
    %1739 = vmatpush1.msra.mxu0 0.0
    %1740 = vmatprep.subr.mxu0 0.0
    %1741 = vmatpush1.msra.mxu0 %v1209
    %1742 = vmatprep.subr.mxu0 0.0
    %1743 = vmatpush1.msra.mxu0 %v1208
    %1744 = vmatprep.subr.mxu0 0.0
    %1745 = vmatpush1.msra.mxu0 %v1207
    %1746 = vmatprep.subr.mxu0 0.0
    %1747 = vmatpush1.msra.mxu0 %v1206
    %1748 = vmatprep.subr.mxu0 0.0
    %1749 = vmatpush2.msra.mxu0 0.0
    %1750 = vmatprep.subr.mxu0 0.0
    %1751 = vmatpush2.msra.mxu0 0.0
    %1752 = vmatprep.subr.mxu0 0.0
    %1753 = vmatpush2.msra.mxu0 0.0
    %1754 = vmatprep.subr.mxu0 0.0
    %1755 = vmatpush2.msra.mxu0 0.0
    %1756 = vmatprep.subr.mxu0 0.0
    %1757 = vmatpush2.msra.mxu0 0.0
    %1758 = vmatprep.subr.mxu0 0.0
    %1759 = vmatpush2.msra.mxu0 0.0
    %1760 = vmatprep.subr.mxu0 0.0
    %1761 = vmatpush2.msra.mxu0 0.0
    %1762 = vmatprep.subr.mxu0 0.0
    %1763 = vmatpush2.msra.mxu0 0.0
    %1764 = vmatprep.subr.mxu0 0.0
    %1765 = vmatpush2.msra.mxu0 0.0
    %1766 = vmatprep.subr.mxu0 0.0
    %1767 = vmatpush2.msra.mxu0 0.0
    %1768 = vmatprep.subr.mxu0 0.0
    %1769 = vmatpush2.msra.mxu0 0.0
    %1770 = vmatprep.subr.mxu0 0.0
    %1771 = vmatpush2.msra.mxu0 0.0
    %1772 = vmatprep.subr.mxu0 0.0
    %1773 = vmatpush2.msra.mxu0 0.0
    %1774 = vmatprep.subr.mxu0 0.0
    %1775 = vmatpush2.msra.mxu0 0.0
    %1776 = vmatprep.subr.mxu0 0.0
    %1777 = vmatpush2.msra.mxu0 0.0
    %1778 = vmatprep.subr.mxu0 0.0
    %1779 = vmatpush2.msra.mxu0 0.0
    %1780 = vmatprep.mubr.f32.mxu0 0.0
    %1781 = vmatmul.mubr.f32.gmra.mxu0 %v1714
    %v1782 = vpop.f32.mrf.mxu0
    %v1783 = vadd.f32 0.0, %v1782
    %v1784 = vpop.f32.mrf.mxu0
    %1785 = vdwg.mxu0
    %v1786 = vadd.f32 %v1710, %v1783
    %v1787 = vxor.u32 %v1786, 2147483648
    %v1788 = vmul.f32 %v1787, 1.442695
    %v1789 = vpow.pop %v1788
    %v1790 = vadd.f32 %v1789, 1.0
    %v1791 = vrcp.pop %v1790
    %v1792 = vmul.f32 1.0, %v1791
    %v1793 = vtanh.pop %v1786
    %v1794 = vmul.f32 %v1792, %v1703
    %1796 = vrot.lane.b32.xlu0 %v1793, 32
    %v1797 = vpop.permute.xlu0 %1796
    %v1799 = vmul.f32 %v1792, %v1797
    %1801 = vrot.lane.b32.xlu0 %v1799, 32
    %v1802 = vpop.permute.xlu0 %1801
    %v1804 = vadd.f32 %v1794, %v1802
    %v1805 = vtanh.pop %v1804
    %1807 = vrot.lane.b32.xlu0 %v1805, 32
    %v1808 = vpop.permute.xlu0 %1807
    %v1810 = vmul.f32 %v1792, %v1808
    %v1811 = vld [vmem:[#allocation2 + $0x30] sm:$0xff]
    %1813 = vrot.lane.b32.xlu0 %v1810, 64
    %v1814 = vpop.permute.xlu0 %1813
    %v1815 = vsel %vm225, %v1814, 0
    %1817 = vmatprep.subr.mxu0 0.0
    %1818 = vmatpush1.msra.mxu0 0.0
    %1819 = vmatprep.subr.mxu0 0.0
    %1820 = vmatpush1.msra.mxu0 0.0
    %1821 = vmatprep.subr.mxu0 0.0
    %1822 = vmatpush1.msra.mxu0 0.0
    %1823 = vmatprep.subr.mxu0 0.0
    %1824 = vmatpush1.msra.mxu0 0.0
    %1825 = vmatprep.subr.mxu0 0.0
    %1826 = vmatpush1.msra.mxu0 0.0
    %1827 = vmatprep.subr.mxu0 0.0
    %1828 = vmatpush1.msra.mxu0 0.0
    %1829 = vmatprep.subr.mxu0 0.0
    %1830 = vmatpush1.msra.mxu0 0.0
    %1831 = vmatprep.subr.mxu0 0.0
    %1832 = vmatpush1.msra.mxu0 0.0
    %1833 = vmatprep.subr.mxu0 0.0
    %1834 = vmatpush1.msra.mxu0 0.0
    %1835 = vmatprep.subr.mxu0 0.0
    %1836 = vmatpush1.msra.mxu0 0.0
    %1837 = vmatprep.subr.mxu0 0.0
    %1838 = vmatpush1.msra.mxu0 0.0
    %1839 = vmatprep.subr.mxu0 0.0
    %1840 = vmatpush1.msra.mxu0 0.0
    %1841 = vmatprep.subr.mxu0 0.0
    %1842 = vmatpush1.msra.mxu0 %v1209
    %1843 = vmatprep.subr.mxu0 0.0
    %1844 = vmatpush1.msra.mxu0 %v1208
    %1845 = vmatprep.subr.mxu0 0.0
    %1846 = vmatpush1.msra.mxu0 %v1207
    %1847 = vmatprep.subr.mxu0 0.0
    %1848 = vmatpush1.msra.mxu0 %v1206
    %1849 = vmatprep.subr.mxu0 0.0
    %1850 = vmatpush2.msra.mxu0 0.0
    %1851 = vmatprep.subr.mxu0 0.0
    %1852 = vmatpush2.msra.mxu0 0.0
    %1853 = vmatprep.subr.mxu0 0.0
    %1854 = vmatpush2.msra.mxu0 0.0
    %1855 = vmatprep.subr.mxu0 0.0
    %1856 = vmatpush2.msra.mxu0 0.0
    %1857 = vmatprep.subr.mxu0 0.0
    %1858 = vmatpush2.msra.mxu0 0.0
    %1859 = vmatprep.subr.mxu0 0.0
    %1860 = vmatpush2.msra.mxu0 0.0
    %1861 = vmatprep.subr.mxu0 0.0
    %1862 = vmatpush2.msra.mxu0 0.0
    %1863 = vmatprep.subr.mxu0 0.0
    %1864 = vmatpush2.msra.mxu0 0.0
    %1865 = vmatprep.subr.mxu0 0.0
    %1866 = vmatpush2.msra.mxu0 0.0
    %1867 = vmatprep.subr.mxu0 0.0
    %1868 = vmatpush2.msra.mxu0 0.0
    %1869 = vmatprep.subr.mxu0 0.0
    %1870 = vmatpush2.msra.mxu0 0.0
    %1871 = vmatprep.subr.mxu0 0.0
    %1872 = vmatpush2.msra.mxu0 0.0
    %1873 = vmatprep.subr.mxu0 0.0
    %1874 = vmatpush2.msra.mxu0 0.0
    %1875 = vmatprep.subr.mxu0 0.0
    %1876 = vmatpush2.msra.mxu0 0.0
    %1877 = vmatprep.subr.mxu0 0.0
    %1878 = vmatpush2.msra.mxu0 0.0
    %1879 = vmatprep.subr.mxu0 0.0
    %1880 = vmatpush2.msra.mxu0 0.0
    %1881 = vmatprep.mubr.f32.mxu0 0.0
    %1882 = vmatmul.mubr.f32.gmra.mxu0 %v1815
    %v1883 = vpop.f32.mrf.mxu0
    %v1884 = vadd.f32 0.0, %v1883
    %v1885 = vpop.f32.mrf.mxu0
    %1886 = vdwg.mxu0
    %v1887 = vadd.f32 %v1811, %v1884
    %v1888 = vxor.u32 %v1887, 2147483648
    %v1889 = vmul.f32 %v1888, 1.442695
    %v1890 = vpow.pop %v1889
    %v1891 = vadd.f32 %v1890, 1.0
    %v1892 = vrcp.pop %v1891
    %v1893 = vmul.f32 1.0, %v1892
    %v1894 = vtanh.pop %v1887
    %v1895 = vmul.f32 %v1893, %v1804
    %1897 = vrot.lane.b32.xlu0 %v1894, 32
    %v1898 = vpop.permute.xlu0 %1897
    %v1900 = vmul.f32 %v1893, %v1898
    %1902 = vrot.lane.b32.xlu0 %v1900, 32
    %v1903 = vpop.permute.xlu0 %1902
    %v1905 = vadd.f32 %v1895, %v1903
    %v1906 = vtanh.pop %v1905
    %1908 = vrot.lane.b32.xlu0 %v1906, 32
    %v1909 = vpop.permute.xlu0 %1908
    %v1911 = vmul.f32 %v1893, %v1909
    %v1912 = vld [vmem:[#allocation2 + $0x38] sm:$0xff]
    %1914 = vrot.lane.b32.xlu0 %v1911, 64
    %v1915 = vpop.permute.xlu0 %1914
    %v1916 = vsel %vm225, %v1915, 0
    %1918 = vmatprep.subr.mxu0 0.0
    %1919 = vmatpush1.msra.mxu0 0.0
    %1920 = vmatprep.subr.mxu0 0.0
    %1921 = vmatpush1.msra.mxu0 0.0
    %1922 = vmatprep.subr.mxu0 0.0
    %1923 = vmatpush1.msra.mxu0 0.0
    %1924 = vmatprep.subr.mxu0 0.0
    %1925 = vmatpush1.msra.mxu0 0.0
    %1926 = vmatprep.subr.mxu0 0.0
    %1927 = vmatpush1.msra.mxu0 0.0
    %1928 = vmatprep.subr.mxu0 0.0
    %1929 = vmatpush1.msra.mxu0 0.0
    %1930 = vmatprep.subr.mxu0 0.0
    %1931 = vmatpush1.msra.mxu0 0.0
    %1932 = vmatprep.subr.mxu0 0.0
    %1933 = vmatpush1.msra.mxu0 0.0
    %1934 = vmatprep.subr.mxu0 0.0
    %1935 = vmatpush1.msra.mxu0 0.0
    %1936 = vmatprep.subr.mxu0 0.0
    %1937 = vmatpush1.msra.mxu0 0.0
    %1938 = vmatprep.subr.mxu0 0.0
    %1939 = vmatpush1.msra.mxu0 0.0
    %1940 = vmatprep.subr.mxu0 0.0
    %1941 = vmatpush1.msra.mxu0 0.0
    %1942 = vmatprep.subr.mxu0 0.0
    %1943 = vmatpush1.msra.mxu0 %v1209
    %1944 = vmatprep.subr.mxu0 0.0
    %1945 = vmatpush1.msra.mxu0 %v1208
    %1946 = vmatprep.subr.mxu0 0.0
    %1947 = vmatpush1.msra.mxu0 %v1207
    %1948 = vmatprep.subr.mxu0 0.0
    %1949 = vmatpush1.msra.mxu0 %v1206
    %1950 = vmatprep.subr.mxu0 0.0
    %1951 = vmatpush2.msra.mxu0 0.0
    %1952 = vmatprep.subr.mxu0 0.0
    %1953 = vmatpush2.msra.mxu0 0.0
    %1954 = vmatprep.subr.mxu0 0.0
    %1955 = vmatpush2.msra.mxu0 0.0
    %1956 = vmatprep.subr.mxu0 0.0
    %1957 = vmatpush2.msra.mxu0 0.0
    %1958 = vmatprep.subr.mxu0 0.0
    %1959 = vmatpush2.msra.mxu0 0.0
    %1960 = vmatprep.subr.mxu0 0.0
    %1961 = vmatpush2.msra.mxu0 0.0
    %1962 = vmatprep.subr.mxu0 0.0
    %1963 = vmatpush2.msra.mxu0 0.0
    %1964 = vmatprep.subr.mxu0 0.0
    %1965 = vmatpush2.msra.mxu0 0.0
    %1966 = vmatprep.subr.mxu0 0.0
    %1967 = vmatpush2.msra.mxu0 0.0
    %1968 = vmatprep.subr.mxu0 0.0
    %1969 = vmatpush2.msra.mxu0 0.0
    %1970 = vmatprep.subr.mxu0 0.0
    %1971 = vmatpush2.msra.mxu0 0.0
    %1972 = vmatprep.subr.mxu0 0.0
    %1973 = vmatpush2.msra.mxu0 0.0
    %1974 = vmatprep.subr.mxu0 0.0
    %1975 = vmatpush2.msra.mxu0 0.0
    %1976 = vmatprep.subr.mxu0 0.0
    %1977 = vmatpush2.msra.mxu0 0.0
    %1978 = vmatprep.subr.mxu0 0.0
    %1979 = vmatpush2.msra.mxu0 0.0
    %1980 = vmatprep.subr.mxu0 0.0
    %1981 = vmatpush2.msra.mxu0 0.0
    %1982 = vmatprep.mubr.f32.mxu0 0.0
    %1983 = vmatmul.mubr.f32.gmra.mxu0 %v1916
    %v1984 = vpop.f32.mrf.mxu0
    %v1985 = vadd.f32 0.0, %v1984
    %v1986 = vpop.f32.mrf.mxu0
    %1987 = vdwg.mxu0
    %v1988 = vadd.f32 %v1912, %v1985
    %v1989 = vxor.u32 %v1988, 2147483648
    %v1990 = vmul.f32 %v1989, 1.442695
    %v1991 = vpow.pop %v1990
    %v1992 = vadd.f32 %v1991, 1.0
    %v1993 = vrcp.pop %v1992
    %v1994 = vmul.f32 1.0, %v1993
    %v1995 = vtanh.pop %v1988
    %v1996 = vmul.f32 %v1994, %v1905
    %1998 = vrot.lane.b32.xlu0 %v1995, 32
    %v1999 = vpop.permute.xlu0 %1998
    %v2001 = vmul.f32 %v1994, %v1999
    %2003 = vrot.lane.b32.xlu0 %v2001, 32
    %v2004 = vpop.permute.xlu0 %2003
    %v2006 = vadd.f32 %v1996, %v2004
    %v2007 = vtanh.pop %v2006
    %2009 = vrot.lane.b32.xlu0 %v2007, 32
    %v2010 = vpop.permute.xlu0 %2009
    %v2012 = vmul.f32 %v1994, %v2010
    %v2013 = vld [vmem:[#allocation7] sm:$0xff]
    %v2014 = vld [vmem:[#allocation7 + $0x8] sm:$0xff]
    %v2015 = vld [vmem:[#allocation7 + $0x10] sm:$0xff]
    %v2016 = vld [vmem:[#allocation7 + $0x18] sm:$0xff]
    %v2017 = vld [vmem:[%s8] sm:$0x1]
    %v2019 = vlaneseq
    %v2020 = vshrl.u32 %v2019, 7
    %v2021 = vsub.s32 0, %v2020
    %v2022 = vrot.slane %v2017, %v2021
    %2025 = vrot.lane.b32.xlu0 %v2012, 64
    %v2026 = vpop.permute.xlu0 %2025
    %v2027 = vsel %vm225, %v2026, 0
    %2029 = vmatprep.subr.mxu0 0.0
    %2030 = vmatpush1.msra.mxu0 0.0
    %2031 = vmatprep.subr.mxu0 0.0
    %2032 = vmatpush1.msra.mxu0 0.0
    %2033 = vmatprep.subr.mxu0 0.0
    %2034 = vmatpush1.msra.mxu0 0.0
    %2035 = vmatprep.subr.mxu0 0.0
    %2036 = vmatpush1.msra.mxu0 0.0
    %2037 = vmatprep.subr.mxu0 0.0
    %2038 = vmatpush1.msra.mxu0 0.0
    %2039 = vmatprep.subr.mxu0 0.0
    %2040 = vmatpush1.msra.mxu0 0.0
    %2041 = vmatprep.subr.mxu0 0.0
    %2042 = vmatpush1.msra.mxu0 0.0
    %2043 = vmatprep.subr.mxu0 0.0
    %2044 = vmatpush1.msra.mxu0 0.0
    %2045 = vmatprep.subr.mxu0 0.0
    %2046 = vmatpush1.msra.mxu0 0.0
    %2047 = vmatprep.subr.mxu0 0.0
    %2048 = vmatpush1.msra.mxu0 0.0
    %2049 = vmatprep.subr.mxu0 0.0
    %2050 = vmatpush1.msra.mxu0 0.0
    %2051 = vmatprep.subr.mxu0 0.0
    %2052 = vmatpush1.msra.mxu0 0.0
    %2053 = vmatprep.subr.mxu0 0.0
    %2054 = vmatpush1.msra.mxu0 %v2016
    %2055 = vmatprep.subr.mxu0 0.0
    %2056 = vmatpush1.msra.mxu0 %v2015
    %2057 = vmatprep.subr.mxu0 0.0
    %2058 = vmatpush1.msra.mxu0 %v2014
    %2059 = vmatprep.subr.mxu0 0.0
    %2060 = vmatpush1.msra.mxu0 %v2013
    %2061 = vmatprep.subr.mxu0 0.0
    %2062 = vmatpush2.msra.mxu0 0.0
    %2063 = vmatprep.subr.mxu0 0.0
    %2064 = vmatpush2.msra.mxu0 0.0
    %2065 = vmatprep.subr.mxu0 0.0
    %2066 = vmatpush2.msra.mxu0 0.0
    %2067 = vmatprep.subr.mxu0 0.0
    %2068 = vmatpush2.msra.mxu0 0.0
    %2069 = vmatprep.subr.mxu0 0.0
    %2070 = vmatpush2.msra.mxu0 0.0
    %2071 = vmatprep.subr.mxu0 0.0
    %2072 = vmatpush2.msra.mxu0 0.0
    %2073 = vmatprep.subr.mxu0 0.0
    %2074 = vmatpush2.msra.mxu0 0.0
    %2075 = vmatprep.subr.mxu0 0.0
    %2076 = vmatpush2.msra.mxu0 0.0
    %2077 = vmatprep.subr.mxu0 0.0
    %2078 = vmatpush2.msra.mxu0 0.0
    %2079 = vmatprep.subr.mxu0 0.0
    %2080 = vmatpush2.msra.mxu0 0.0
    %2081 = vmatprep.subr.mxu0 0.0
    %2082 = vmatpush2.msra.mxu0 0.0
    %2083 = vmatprep.subr.mxu0 0.0
    %2084 = vmatpush2.msra.mxu0 0.0
    %2085 = vmatprep.subr.mxu0 0.0
    %2086 = vmatpush2.msra.mxu0 0.0
    %2087 = vmatprep.subr.mxu0 0.0
    %2088 = vmatpush2.msra.mxu0 0.0
    %2089 = vmatprep.subr.mxu0 0.0
    %2090 = vmatpush2.msra.mxu0 0.0
    %2091 = vmatprep.subr.mxu0 0.0
    %2092 = vmatpush2.msra.mxu0 0.0
    %2093 = vmatprep.mubr.f32.mxu0 0.0
    %2094 = vmatmul.mubr.f32.gmra.mxu0 %v2027
    %v2095 = vpop.f32.mrf.mxu0
    %v2096 = vadd.f32 %v2022, %v2095
    %v2097 = vpop.f32.mrf.mxu0
    %2098 = vdwg.mxu0
    %2099 = vst [vmem:[#allocation9] sm:$0xff] %v2096
    // Predicated region
    $region46: #{tpu_custom_call.1} parent=1 // pred_check
      _
    $region47: #{tpu_custom_call.1} parent=1 // pred_check_branch
      %2101 = sbr.rel (0) target = $region49
    $region48: #{tpu_custom_call.1} parent=1 // pred_region
      %s2103 = ssub.s32 128, 128
      %2104 = vsyncadd [#allocation6], %s2103
      %s2106 = sshll.u32 [#allocation9], 4
      %s2107 = int_to_ptr.vmem [resolvable:$true] %s2106
      %2109 = dma.vmem_to_hbm [thread:$0]  %s2107, 128, %s9, [#allocation6]
    $region49: #{tpu_custom_call.1} parent=1 // pred_fallthru
      _
    // Predicated region
    $region50: #{tpu_custom_call.1} parent=1 // pred_check
      _
    $region51: #{tpu_custom_call.1} parent=1 // pred_check_branch
      %2111 = sbr.rel (0) target = $region53
    $region52: #{tpu_custom_call.1} parent=1 // pred_region
      %2112 = dma.done [#allocation6], 128
    $region53: #{tpu_custom_call.1} parent=1 // pred_fallthru
      _
    %2113 = vsyncpa [#allocation5], 1
    %2114 = vsyncpa [#allocation8], 1
    %2115 = vsyncpa [#allocation6], 1

</llo_original>
